<compile_context>
chip_gen: v5e
topology: v5e:2x2
jax: 0.10.0
libtpu: 0.0.40
codegen_flags: <defaults>
</compile_context>

<pallas_src>
import jax
import jax.numpy as jnp
from jax.experimental import pallas as pl
from jax.experimental.pallas import tpu as pltpu


# ----------------------------------------------------------------------------
# Fused kernel: num_layers x LSTM  +  dense head, one pallas_call, no scratch.
# ----------------------------------------------------------------------------
def _make_fused_kernel(T, B, H, num_layers, num_dense, dense_acts):
    """Ref order: x_flat, (w_ih_t, w_hh_t, b) * num_layers,
                  (w_t, b) * num_dense, out, h_n, c_n."""

    def kernel(*refs):
        idx = 0
        x_ref = refs[idx]; idx += 1
        lstm_refs = []
        for _ in range(num_layers):
            lstm_refs.append((refs[idx], refs[idx + 1], refs[idx + 2]))
            idx += 3
        dense_refs = []
        for _ in range(num_dense):
            dense_refs.append((refs[idx], refs[idx + 1]))
            idx += 2
        out_ref, hn_ref, cn_ref = refs[idx], refs[idx + 1], refs[idx + 2]

        def lstm_cell(g, c_prev):
            # Full 128-lane transcendentals (EUP slot is idle); H-wide lane
            # extracts happen afterwards.  PyTorch gate order [i, f, g, o].
            sig = jax.nn.sigmoid(g)
            tan = jnp.tanh(g)
            i_g = sig[:, 0 * H:1 * H]
            f_g = sig[:, 1 * H:2 * H]
            g_g = tan[:, 2 * H:3 * H]
            o_g = sig[:, 3 * H:4 * H]
            if c_prev is None:                 # t == 0: h0 = c0 = 0
                c_new = i_g * g_g
            else:
                c_new = f_g * c_prev + i_g * g_g
            h_new = o_g * jnp.tanh(c_new)
            return h_new, c_new

        # Layer 0: input projection hoisted over the whole sequence as one
        # (T*B, D) @ (D, 4H) matmul, kept as an SSA value (8 vregs).
        wih0_ref, _, b0_ref = lstm_refs[0]
        x_bf = x_ref[...].astype(jnp.bfloat16)
        gates0 = (jnp.dot(x_bf, wih0_ref[...],
                          preferred_element_type=jnp.float32)
                  + b0_ref[...])

        prev_hs = None                         # per-step outputs of layer below
        for layer in range(num_layers):
            wih_ref, whh_ref, b_ref = lstm_refs[layer]
            whh = whh_ref[...]                 # (H, 4H) bf16, stays in vregs
            if layer > 0:
                wih = wih_ref[...]
                bias = b_ref[...]

            h = None
            c = None
            hs = []
            for t in range(T):
                if layer == 0:
                    g_in = gates0[t * B:(t + 1) * B, :]    # static vreg slice
                else:
                    # Depends only on the below layer's step t -> off this
                    # layer's serial chain.  Separate dot (no lane concat of
                    # [h_below, h_prev]) keeps h_prev out of a relayout.
                    g_in = (jnp.dot(prev_hs[t].astype(jnp.bfloat16), wih,
                                    preferred_element_type=jnp.float32)
                            + bias)
                if t == 0:
                    g = g_in                   # h0 == 0: skip recurrent matmul
                else:
                    g = (jnp.dot(h.astype(jnp.bfloat16), whh,
                                 preferred_element_type=jnp.float32)
                         + g_in)
                h, c = lstm_cell(g, c)
                hs.append(h)

            hn_ref[layer] = h                  # one epilogue store per layer
            cn_ref[layer] = c
            prev_hs = hs

        # Dense head on the whole flattened (T*B, H) sequence, in-register.
        y = jnp.concatenate(prev_hs, axis=0)   # (T*B, H) f32, sublane stack
        for d, (w_ref, db_ref) in enumerate(dense_refs):
            y = (jnp.dot(y.astype(jnp.bfloat16), w_ref[...],
                         preferred_element_type=jnp.float32)
                 + db_ref[...])
            if dense_acts[d]:
                y = jnp.maximum(y, 0.0)
        out_ref[...] = y.astype(out_ref.dtype)  # lane-dense (padded) store

    return kernel


# ----------------------------------------------------------------------------
# Parameter construction (mirrors the module's __init__ shapes).
# ----------------------------------------------------------------------------
def init_params(key, input_size, hidden_size, output_size, num_layers,
                dense_layers):
    params = {'lstm': [], 'dense': []}
    bound = 1.0 / (hidden_size ** 0.5)

    def uni(k, shape):
        return jax.random.uniform(k, shape, jnp.float32, -bound, bound)

    for layer in range(num_layers):
        d_in = input_size if layer == 0 else hidden_size
        key, k1, k2, k3, k4 = jax.random.split(key, 5)
        w_ih = uni(k1, (4 * hidden_size, d_in))          # weight_ih_l{k}
        w_hh = uni(k2, (4 * hidden_size, hidden_size))   # weight_hh_l{k}
        b_ih = uni(k3, (4 * hidden_size,))
        b_hh = uni(k4, (4 * hidden_size,))
        params['lstm'].append({
            # bf16 MXU operands; PyTorch [i,f,g,o] gate order kept as-is.
            'w_ih_t': jnp.transpose(w_ih).astype(jnp.bfloat16),  # (D_in, 4H)
            'w_hh_t': jnp.transpose(w_hh).astype(jnp.bfloat16),  # (H, 4H)
            'b': (b_ih + b_hh).reshape(1, -1),                   # (1, 4H) f32
        })

    # TODO(synk): the module's act_func is an arbitrary ctor arg; ReLU assumed.
    d_in = hidden_size
    for n in dense_layers:
        key, k1, k2 = jax.random.split(key, 3)
        w = uni(k1, (n, d_in))                           # nn.Linear (out, in)
        b = uni(k2, (n,))
        params['dense'].append(
            (jnp.transpose(w).astype(jnp.bfloat16), b.reshape(1, -1), True))
        d_in = n
    key, k1, k2 = jax.random.split(key, 3)
    w = uni(k1, (output_size, d_in))
    b = uni(k2, (output_size,))
    params['dense'].append(
        (jnp.transpose(w).astype(jnp.bfloat16), b.reshape(1, -1), False))
    return params


# ----------------------------------------------------------------------------
# Forward (matches DecoderLSTMRepeat.forward)
# ----------------------------------------------------------------------------
def decoder_lstm_repeat_forward(params, inputs):
    """inputs: (seq_len, batch, input_size) -> (output, (h_n, c_n))."""
    T, B, D_in = inputs.shape
    H = params['lstm'][0]['w_hh_t'].shape[0]
    num_layers = len(params['lstm'])
    dense = params['dense']
    num_dense = len(dense)
    out_size = dense[-1][0].shape[1]
    dense_acts = tuple(act for (_, _, act) in dense)

    # Lane-dense output: zero-pad the final dense layer's columns to a
    # multiple of 128 so the kernel's last store / writeback DMA is unmasked.
    out_pad = max(128, ((out_size + 127) // 128) * 128)
    dense_args = []
    for i, (w_t, b, _) in enumerate(dense):
        if i == num_dense - 1 and out_pad != out_size:
            w_t = jnp.pad(w_t, ((0, 0), (0, out_pad - out_size)))
            b = jnp.pad(b, ((0, 0), (0, out_pad - out_size)))
        dense_args += [w_t, b]

    x_flat = inputs.reshape(T * B, D_in)
    args = [x_flat]
    for lp in params['lstm']:
        args += [lp['w_ih_t'], lp['w_hh_t'], lp['b']]
    args += dense_args

    # Advisory cost estimate so XLA can overlap the tiny kernel.
    flops = 2 * T * B * D_in * 4 * H                     # layer-0 input proj
    flops += num_layers * 2 * (T - 1) * B * H * 4 * H    # recurrent dots
    flops += (num_layers - 1) * 2 * T * B * H * 4 * H    # per-step below proj
    k = H
    for (w_t, _, _) in dense:
        flops += 2 * T * B * k * w_t.shape[1]
        k = w_t.shape[1]
    transcendentals = num_layers * T * B * 9 * H          # sig + 2x tanh
    bytes_accessed = sum(int(a.size) * a.dtype.itemsize for a in args)
    bytes_accessed += (T * B * out_pad + 2 * num_layers * B * H) * 4

    vmem = pl.BlockSpec(memory_space=pltpu.MemorySpace.VMEM)
    kernel = _make_fused_kernel(T, B, H, num_layers, num_dense, dense_acts)

    out_slab, h_n, c_n = pl.pallas_call(
        kernel,
        out_shape=(jax.ShapeDtypeStruct((T * B, out_pad), jnp.float32),
                   jax.ShapeDtypeStruct((num_layers, B, H), jnp.float32),
                   jax.ShapeDtypeStruct((num_layers, B, H), jnp.float32)),
        in_specs=[vmem] * len(args),
        out_specs=(vmem, vmem, vmem),
        cost_estimate=pl.CostEstimate(flops=int(flops),
                                      transcendentals=int(transcendentals),
                                      bytes_accessed=int(bytes_accessed)),
    )(*args)

    out_flat = out_slab[:, :out_size]
    # torch .squeeze(0): only drops the leading dim when seq_len == 1.
    if T == 1:
        output = out_flat.reshape(B, out_size)
    else:
        output = out_flat.reshape(T, B, out_size)
    return output, (h_n, c_n)


# ----------------------------------------------------------------------------
if __name__ == "__main__":
    SEQ, BATCH = 8, 8
    INPUT_SIZE, HIDDEN_SIZE, OUTPUT_SIZE = 32, 32, 16
    NUM_LAYERS = 2
    DENSE_LAYERS = (32,)                                  # + ReLU after each

    key = jax.random.PRNGKey(0)
    key, pkey, xkey = jax.random.split(key, 3)
    params = init_params(pkey, INPUT_SIZE, HIDDEN_SIZE, OUTPUT_SIZE,
                         NUM_LAYERS, DENSE_LAYERS)
    inputs = jax.random.normal(xkey, (SEQ, BATCH, INPUT_SIZE), jnp.float32)

    output, (h_n, c_n) = decoder_lstm_repeat_forward(params, inputs)
    jax.block_until_ready((output, h_n, c_n))

    assert output.shape == (SEQ, BATCH, OUTPUT_SIZE)
    assert h_n.shape == (NUM_LAYERS, BATCH, HIDDEN_SIZE)
    assert c_n.shape == (NUM_LAYERS, BATCH, HIDDEN_SIZE)
    assert bool(jnp.all(jnp.isfinite(output)))
    assert bool(jnp.all(jnp.isfinite(h_n))) and bool(jnp.all(jnp.isfinite(c_n)))
    print("KERNEL_OK")
</pallas_src>

<mosaic_0001>
module attributes {stable_mosaic.version = 11 : i64} {
  func.func @kernel(%arg0: memref<64x32xf32, #tpu.memory_space<vmem>>, %arg1: memref<32x128xbf16, #tpu.memory_space<vmem>>, %arg2: memref<32x128xbf16, #tpu.memory_space<vmem>>, %arg3: memref<1x128xf32, #tpu.memory_space<vmem>>, %arg4: memref<32x128xbf16, #tpu.memory_space<vmem>>, %arg5: memref<32x128xbf16, #tpu.memory_space<vmem>>, %arg6: memref<1x128xf32, #tpu.memory_space<vmem>>, %arg7: memref<32x32xbf16, #tpu.memory_space<vmem>>, %arg8: memref<1x32xf32, #tpu.memory_space<vmem>>, %arg9: memref<32x128xbf16, #tpu.memory_space<vmem>>, %arg10: memref<1x128xf32, #tpu.memory_space<vmem>>, %arg11: memref<64x128xf32, #tpu.memory_space<vmem>>, %arg12: memref<2x8x32xf32, #tpu.memory_space<vmem>>, %arg13: memref<2x8x32xf32, #tpu.memory_space<vmem>>) attributes {dimension_semantics = [], scalar_prefetch = 0 : i64, scratch_operands = 0 : i64, tpu.core_type = #tpu.core_type<tc>} {
    %c0 = arith.constant 0 : index
    %c0_0 = arith.constant 0 : index
    %0 = vector.load %arg0[%c0, %c0_0] : memref<64x32xf32, #tpu.memory_space<vmem>>, vector<64x32xf32>
    %1 = arith.truncf %0 : vector<64x32xf32> to vector<64x32xbf16>
    %c0_1 = arith.constant 0 : index
    %c0_2 = arith.constant 0 : index
    %2 = vector.load %arg1[%c0_1, %c0_2] : memref<32x128xbf16, #tpu.memory_space<vmem>>, vector<32x128xbf16>
    %cst = arith.constant dense<0.000000e+00> : vector<64x128xf32>
    %3 = tpu.matmul %1, %2, %cst {dimension_numbers = #tpu.dot_dimension_numbers<[1], [0], [0], [1], [0, 0, 1, 1], [], []>} : vector<64x32xbf16>, vector<32x128xbf16>, vector<64x128xf32> -> vector<64x128xf32>
    %c0_3 = arith.constant 0 : index
    %c0_4 = arith.constant 0 : index
    %4 = vector.load %arg3[%c0_3, %c0_4] : memref<1x128xf32, #tpu.memory_space<vmem>>, vector<1x128xf32>
    %5 = vector.broadcast %4 : vector<1x128xf32> to vector<64x128xf32>
    %6 = arith.addf %3, %5 : vector<64x128xf32>
    %c0_5 = arith.constant 0 : index
    %c0_6 = arith.constant 0 : index
    %7 = vector.load %arg2[%c0_5, %c0_6] : memref<32x128xbf16, #tpu.memory_space<vmem>>, vector<32x128xbf16>
    %8 = vector.extract_strided_slice %6 {offsets = [0, 0], sizes = [8, 128], strides = [1, 1]} : vector<64x128xf32> to vector<8x128xf32>
    %9 = arith.negf %8 : vector<8x128xf32>
    %10 = math.exp %9 : vector<8x128xf32>
    %cst_7 = arith.constant 1.000000e+00 : f32
    %11 = vector.broadcast %cst_7 : f32 to vector<8x128xf32>
    %12 = arith.addf %11, %10 : vector<8x128xf32>
    %13 = arith.divf %11, %12 : vector<8x128xf32>
    %14 = math.tanh %8 : vector<8x128xf32>
    %15 = vector.extract_strided_slice %13 {offsets = [0, 0], sizes = [8, 32], strides = [1, 1]} : vector<8x128xf32> to vector<8x32xf32>
    %16 = vector.extract_strided_slice %14 {offsets = [0, 64], sizes = [8, 32], strides = [1, 1]} : vector<8x128xf32> to vector<8x32xf32>
    %17 = vector.extract_strided_slice %13 {offsets = [0, 96], sizes = [8, 32], strides = [1, 1]} : vector<8x128xf32> to vector<8x32xf32>
    %18 = arith.mulf %15, %16 : vector<8x32xf32>
    %19 = math.tanh %18 : vector<8x32xf32>
    %20 = arith.mulf %17, %19 : vector<8x32xf32>
    %21 = vector.extract_strided_slice %6 {offsets = [8, 0], sizes = [8, 128], strides = [1, 1]} : vector<64x128xf32> to vector<8x128xf32>
    %22 = arith.truncf %20 : vector<8x32xf32> to vector<8x32xbf16>
    %cst_8 = arith.constant dense<0.000000e+00> : vector<8x128xf32>
    %23 = tpu.matmul %22, %7, %cst_8 {dimension_numbers = #tpu.dot_dimension_numbers<[1], [0], [0], [1], [0, 0, 1, 1], [], []>} : vector<8x32xbf16>, vector<32x128xbf16>, vector<8x128xf32> -> vector<8x128xf32>
    %24 = arith.addf %23, %21 : vector<8x128xf32>
    %25 = arith.negf %24 : vector<8x128xf32>
    %26 = math.exp %25 : vector<8x128xf32>
    %cst_9 = arith.constant 1.000000e+00 : f32
    %27 = vector.broadcast %cst_9 : f32 to vector<8x128xf32>
    %28 = arith.addf %27, %26 : vector<8x128xf32>
    %29 = arith.divf %27, %28 : vector<8x128xf32>
    %30 = math.tanh %24 : vector<8x128xf32>
    %31 = vector.extract_strided_slice %29 {offsets = [0, 0], sizes = [8, 32], strides = [1, 1]} : vector<8x128xf32> to vector<8x32xf32>
    %32 = vector.extract_strided_slice %29 {offsets = [0, 32], sizes = [8, 32], strides = [1, 1]} : vector<8x128xf32> to vector<8x32xf32>
    %33 = vector.extract_strided_slice %30 {offsets = [0, 64], sizes = [8, 32], strides = [1, 1]} : vector<8x128xf32> to vector<8x32xf32>
    %34 = vector.extract_strided_slice %29 {offsets = [0, 96], sizes = [8, 32], strides = [1, 1]} : vector<8x128xf32> to vector<8x32xf32>
    %35 = arith.mulf %32, %18 : vector<8x32xf32>
    %36 = arith.mulf %31, %33 : vector<8x32xf32>
    %37 = arith.addf %35, %36 : vector<8x32xf32>
    %38 = math.tanh %37 : vector<8x32xf32>
    %39 = arith.mulf %34, %38 : vector<8x32xf32>
    %40 = vector.extract_strided_slice %6 {offsets = [16, 0], sizes = [8, 128], strides = [1, 1]} : vector<64x128xf32> to vector<8x128xf32>
    %41 = arith.truncf %39 : vector<8x32xf32> to vector<8x32xbf16>
    %cst_10 = arith.constant dense<0.000000e+00> : vector<8x128xf32>
    %42 = tpu.matmul %41, %7, %cst_10 {dimension_numbers = #tpu.dot_dimension_numbers<[1], [0], [0], [1], [0, 0, 1, 1], [], []>} : vector<8x32xbf16>, vector<32x128xbf16>, vector<8x128xf32> -> vector<8x128xf32>
    %43 = arith.addf %42, %40 : vector<8x128xf32>
    %44 = arith.negf %43 : vector<8x128xf32>
    %45 = math.exp %44 : vector<8x128xf32>
    %cst_11 = arith.constant 1.000000e+00 : f32
    %46 = vector.broadcast %cst_11 : f32 to vector<8x128xf32>
    %47 = arith.addf %46, %45 : vector<8x128xf32>
    %48 = arith.divf %46, %47 : vector<8x128xf32>
    %49 = math.tanh %43 : vector<8x128xf32>
    %50 = vector.extract_strided_slice %48 {offsets = [0, 0], sizes = [8, 32], strides = [1, 1]} : vector<8x128xf32> to vector<8x32xf32>
    %51 = vector.extract_strided_slice %48 {offsets = [0, 32], sizes = [8, 32], strides = [1, 1]} : vector<8x128xf32> to vector<8x32xf32>
    %52 = vector.extract_strided_slice %49 {offsets = [0, 64], sizes = [8, 32], strides = [1, 1]} : vector<8x128xf32> to vector<8x32xf32>
    %53 = vector.extract_strided_slice %48 {offsets = [0, 96], sizes = [8, 32], strides = [1, 1]} : vector<8x128xf32> to vector<8x32xf32>
    %54 = arith.mulf %51, %37 : vector<8x32xf32>
    %55 = arith.mulf %50, %52 : vector<8x32xf32>
    %56 = arith.addf %54, %55 : vector<8x32xf32>
    %57 = math.tanh %56 : vector<8x32xf32>
    %58 = arith.mulf %53, %57 : vector<8x32xf32>
    %59 = vector.extract_strided_slice %6 {offsets = [24, 0], sizes = [8, 128], strides = [1, 1]} : vector<64x128xf32> to vector<8x128xf32>
    %60 = arith.truncf %58 : vector<8x32xf32> to vector<8x32xbf16>
    %cst_12 = arith.constant dense<0.000000e+00> : vector<8x128xf32>
    %61 = tpu.matmul %60, %7, %cst_12 {dimension_numbers = #tpu.dot_dimension_numbers<[1], [0], [0], [1], [0, 0, 1, 1], [], []>} : vector<8x32xbf16>, vector<32x128xbf16>, vector<8x128xf32> -> vector<8x128xf32>
    %62 = arith.addf %61, %59 : vector<8x128xf32>
    %63 = arith.negf %62 : vector<8x128xf32>
    %64 = math.exp %63 : vector<8x128xf32>
    %cst_13 = arith.constant 1.000000e+00 : f32
    %65 = vector.broadcast %cst_13 : f32 to vector<8x128xf32>
    %66 = arith.addf %65, %64 : vector<8x128xf32>
    %67 = arith.divf %65, %66 : vector<8x128xf32>
    %68 = math.tanh %62 : vector<8x128xf32>
    %69 = vector.extract_strided_slice %67 {offsets = [0, 0], sizes = [8, 32], strides = [1, 1]} : vector<8x128xf32> to vector<8x32xf32>
    %70 = vector.extract_strided_slice %67 {offsets = [0, 32], sizes = [8, 32], strides = [1, 1]} : vector<8x128xf32> to vector<8x32xf32>
    %71 = vector.extract_strided_slice %68 {offsets = [0, 64], sizes = [8, 32], strides = [1, 1]} : vector<8x128xf32> to vector<8x32xf32>
    %72 = vector.extract_strided_slice %67 {offsets = [0, 96], sizes = [8, 32], strides = [1, 1]} : vector<8x128xf32> to vector<8x32xf32>
    %73 = arith.mulf %70, %56 : vector<8x32xf32>
    %74 = arith.mulf %69, %71 : vector<8x32xf32>
    %75 = arith.addf %73, %74 : vector<8x32xf32>
    %76 = math.tanh %75 : vector<8x32xf32>
    %77 = arith.mulf %72, %76 : vector<8x32xf32>
    %78 = vector.extract_strided_slice %6 {offsets = [32, 0], sizes = [8, 128], strides = [1, 1]} : vector<64x128xf32> to vector<8x128xf32>
    %79 = arith.truncf %77 : vector<8x32xf32> to vector<8x32xbf16>
    %cst_14 = arith.constant dense<0.000000e+00> : vector<8x128xf32>
    %80 = tpu.matmul %79, %7, %cst_14 {dimension_numbers = #tpu.dot_dimension_numbers<[1], [0], [0], [1], [0, 0, 1, 1], [], []>} : vector<8x32xbf16>, vector<32x128xbf16>, vector<8x128xf32> -> vector<8x128xf32>
    %81 = arith.addf %80, %78 : vector<8x128xf32>
    %82 = arith.negf %81 : vector<8x128xf32>
    %83 = math.exp %82 : vector<8x128xf32>
    %cst_15 = arith.constant 1.000000e+00 : f32
    %84 = vector.broadcast %cst_15 : f32 to vector<8x128xf32>
    %85 = arith.addf %84, %83 : vector<8x128xf32>
    %86 = arith.divf %84, %85 : vector<8x128xf32>
    %87 = math.tanh %81 : vector<8x128xf32>
    %88 = vector.extract_strided_slice %86 {offsets = [0, 0], sizes = [8, 32], strides = [1, 1]} : vector<8x128xf32> to vector<8x32xf32>
    %89 = vector.extract_strided_slice %86 {offsets = [0, 32], sizes = [8, 32], strides = [1, 1]} : vector<8x128xf32> to vector<8x32xf32>
    %90 = vector.extract_strided_slice %87 {offsets = [0, 64], sizes = [8, 32], strides = [1, 1]} : vector<8x128xf32> to vector<8x32xf32>
    %91 = vector.extract_strided_slice %86 {offsets = [0, 96], sizes = [8, 32], strides = [1, 1]} : vector<8x128xf32> to vector<8x32xf32>
    %92 = arith.mulf %89, %75 : vector<8x32xf32>
    %93 = arith.mulf %88, %90 : vector<8x32xf32>
    %94 = arith.addf %92, %93 : vector<8x32xf32>
    %95 = math.tanh %94 : vector<8x32xf32>
    %96 = arith.mulf %91, %95 : vector<8x32xf32>
    %97 = vector.extract_strided_slice %6 {offsets = [40, 0], sizes = [8, 128], strides = [1, 1]} : vector<64x128xf32> to vector<8x128xf32>
    %98 = arith.truncf %96 : vector<8x32xf32> to vector<8x32xbf16>
    %cst_16 = arith.constant dense<0.000000e+00> : vector<8x128xf32>
    %99 = tpu.matmul %98, %7, %cst_16 {dimension_numbers = #tpu.dot_dimension_numbers<[1], [0], [0], [1], [0, 0, 1, 1], [], []>} : vector<8x32xbf16>, vector<32x128xbf16>, vector<8x128xf32> -> vector<8x128xf32>
    %100 = arith.addf %99, %97 : vector<8x128xf32>
    %101 = arith.negf %100 : vector<8x128xf32>
    %102 = math.exp %101 : vector<8x128xf32>
    %cst_17 = arith.constant 1.000000e+00 : f32
    %103 = vector.broadcast %cst_17 : f32 to vector<8x128xf32>
    %104 = arith.addf %103, %102 : vector<8x128xf32>
    %105 = arith.divf %103, %104 : vector<8x128xf32>
    %106 = math.tanh %100 : vector<8x128xf32>
    %107 = vector.extract_strided_slice %105 {offsets = [0, 0], sizes = [8, 32], strides = [1, 1]} : vector<8x128xf32> to vector<8x32xf32>
    %108 = vector.extract_strided_slice %105 {offsets = [0, 32], sizes = [8, 32], strides = [1, 1]} : vector<8x128xf32> to vector<8x32xf32>
    %109 = vector.extract_strided_slice %106 {offsets = [0, 64], sizes = [8, 32], strides = [1, 1]} : vector<8x128xf32> to vector<8x32xf32>
    %110 = vector.extract_strided_slice %105 {offsets = [0, 96], sizes = [8, 32], strides = [1, 1]} : vector<8x128xf32> to vector<8x32xf32>
    %111 = arith.mulf %108, %94 : vector<8x32xf32>
    %112 = arith.mulf %107, %109 : vector<8x32xf32>
    %113 = arith.addf %111, %112 : vector<8x32xf32>
    %114 = math.tanh %113 : vector<8x32xf32>
    %115 = arith.mulf %110, %114 : vector<8x32xf32>
    %116 = vector.extract_strided_slice %6 {offsets = [48, 0], sizes = [8, 128], strides = [1, 1]} : vector<64x128xf32> to vector<8x128xf32>
    %117 = arith.truncf %115 : vector<8x32xf32> to vector<8x32xbf16>
    %cst_18 = arith.constant dense<0.000000e+00> : vector<8x128xf32>
    %118 = tpu.matmul %117, %7, %cst_18 {dimension_numbers = #tpu.dot_dimension_numbers<[1], [0], [0], [1], [0, 0, 1, 1], [], []>} : vector<8x32xbf16>, vector<32x128xbf16>, vector<8x128xf32> -> vector<8x128xf32>
    %119 = arith.addf %118, %116 : vector<8x128xf32>
    %120 = arith.negf %119 : vector<8x128xf32>
    %121 = math.exp %120 : vector<8x128xf32>
    %cst_19 = arith.constant 1.000000e+00 : f32
    %122 = vector.broadcast %cst_19 : f32 to vector<8x128xf32>
    %123 = arith.addf %122, %121 : vector<8x128xf32>
    %124 = arith.divf %122, %123 : vector<8x128xf32>
    %125 = math.tanh %119 : vector<8x128xf32>
    %126 = vector.extract_strided_slice %124 {offsets = [0, 0], sizes = [8, 32], strides = [1, 1]} : vector<8x128xf32> to vector<8x32xf32>
    %127 = vector.extract_strided_slice %124 {offsets = [0, 32], sizes = [8, 32], strides = [1, 1]} : vector<8x128xf32> to vector<8x32xf32>
    %128 = vector.extract_strided_slice %125 {offsets = [0, 64], sizes = [8, 32], strides = [1, 1]} : vector<8x128xf32> to vector<8x32xf32>
    %129 = vector.extract_strided_slice %124 {offsets = [0, 96], sizes = [8, 32], strides = [1, 1]} : vector<8x128xf32> to vector<8x32xf32>
    %130 = arith.mulf %127, %113 : vector<8x32xf32>
    %131 = arith.mulf %126, %128 : vector<8x32xf32>
    %132 = arith.addf %130, %131 : vector<8x32xf32>
    %133 = math.tanh %132 : vector<8x32xf32>
    %134 = arith.mulf %129, %133 : vector<8x32xf32>
    %135 = vector.extract_strided_slice %6 {offsets = [56, 0], sizes = [8, 128], strides = [1, 1]} : vector<64x128xf32> to vector<8x128xf32>
    %136 = arith.truncf %134 : vector<8x32xf32> to vector<8x32xbf16>
    %cst_20 = arith.constant dense<0.000000e+00> : vector<8x128xf32>
    %137 = tpu.matmul %136, %7, %cst_20 {dimension_numbers = #tpu.dot_dimension_numbers<[1], [0], [0], [1], [0, 0, 1, 1], [], []>} : vector<8x32xbf16>, vector<32x128xbf16>, vector<8x128xf32> -> vector<8x128xf32>
    %138 = arith.addf %137, %135 : vector<8x128xf32>
    %139 = arith.negf %138 : vector<8x128xf32>
    %140 = math.exp %139 : vector<8x128xf32>
    %cst_21 = arith.constant 1.000000e+00 : f32
    %141 = vector.broadcast %cst_21 : f32 to vector<8x128xf32>
    %142 = arith.addf %141, %140 : vector<8x128xf32>
    %143 = arith.divf %141, %142 : vector<8x128xf32>
    %144 = math.tanh %138 : vector<8x128xf32>
    %145 = vector.extract_strided_slice %143 {offsets = [0, 0], sizes = [8, 32], strides = [1, 1]} : vector<8x128xf32> to vector<8x32xf32>
    %146 = vector.extract_strided_slice %143 {offsets = [0, 32], sizes = [8, 32], strides = [1, 1]} : vector<8x128xf32> to vector<8x32xf32>
    %147 = vector.extract_strided_slice %144 {offsets = [0, 64], sizes = [8, 32], strides = [1, 1]} : vector<8x128xf32> to vector<8x32xf32>
    %148 = vector.extract_strided_slice %143 {offsets = [0, 96], sizes = [8, 32], strides = [1, 1]} : vector<8x128xf32> to vector<8x32xf32>
    %149 = arith.mulf %146, %132 : vector<8x32xf32>
    %150 = arith.mulf %145, %147 : vector<8x32xf32>
    %151 = arith.addf %149, %150 : vector<8x32xf32>
    %152 = math.tanh %151 : vector<8x32xf32>
    %153 = arith.mulf %148, %152 : vector<8x32xf32>
    %c0_22 = arith.constant 0 : index
    %c0_23 = arith.constant 0 : index
    %c0_24 = arith.constant 0 : index
    %154 = vector.load %arg12[%c0_22, %c0_23, %c0_24] : memref<2x8x32xf32, #tpu.memory_space<vmem>>, vector<1x8x32xf32>
    %155 = vector.shape_cast %154 : vector<1x8x32xf32> to vector<8x32xf32>
    %156 = vector.shape_cast %153 : vector<8x32xf32> to vector<1x8x32xf32>
    tpu.vector_store %arg12[%c0_22, %c0_23, %c0_24], %156 {strides = array<i32>} : memref<2x8x32xf32, #tpu.memory_space<vmem>>, vector<1x8x32xf32>,
    %c0_25 = arith.constant 0 : index
    %c0_26 = arith.constant 0 : index
    %c0_27 = arith.constant 0 : index
    %157 = vector.load %arg13[%c0_25, %c0_26, %c0_27] : memref<2x8x32xf32, #tpu.memory_space<vmem>>, vector<1x8x32xf32>
    %158 = vector.shape_cast %157 : vector<1x8x32xf32> to vector<8x32xf32>
    %159 = vector.shape_cast %151 : vector<8x32xf32> to vector<1x8x32xf32>
    tpu.vector_store %arg13[%c0_25, %c0_26, %c0_27], %159 {strides = array<i32>} : memref<2x8x32xf32, #tpu.memory_space<vmem>>, vector<1x8x32xf32>,
    %c0_28 = arith.constant 0 : index
    %c0_29 = arith.constant 0 : index
    %160 = vector.load %arg5[%c0_28, %c0_29] : memref<32x128xbf16, #tpu.memory_space<vmem>>, vector<32x128xbf16>
    %c0_30 = arith.constant 0 : index
    %c0_31 = arith.constant 0 : index
    %161 = vector.load %arg4[%c0_30, %c0_31] : memref<32x128xbf16, #tpu.memory_space<vmem>>, vector<32x128xbf16>
    %c0_32 = arith.constant 0 : index
    %c0_33 = arith.constant 0 : index
    %162 = vector.load %arg6[%c0_32, %c0_33] : memref<1x128xf32, #tpu.memory_space<vmem>>, vector<1x128xf32>
    %163 = arith.truncf %20 : vector<8x32xf32> to vector<8x32xbf16>
    %cst_34 = arith.constant dense<0.000000e+00> : vector<8x128xf32>
    %164 = tpu.matmul %163, %161, %cst_34 {dimension_numbers = #tpu.dot_dimension_numbers<[1], [0], [0], [1], [0, 0, 1, 1], [], []>} : vector<8x32xbf16>, vector<32x128xbf16>, vector<8x128xf32> -> vector<8x128xf32>
    %165 = vector.broadcast %162 : vector<1x128xf32> to vector<8x128xf32>
    %166 = arith.addf %164, %165 : vector<8x128xf32>
    %167 = arith.negf %166 : vector<8x128xf32>
    %168 = math.exp %167 : vector<8x128xf32>
    %cst_35 = arith.constant 1.000000e+00 : f32
    %169 = vector.broadcast %cst_35 : f32 to vector<8x128xf32>
    %170 = arith.addf %169, %168 : vector<8x128xf32>
    %171 = arith.divf %169, %170 : vector<8x128xf32>
    %172 = math.tanh %166 : vector<8x128xf32>
    %173 = vector.extract_strided_slice %171 {offsets = [0, 0], sizes = [8, 32], strides = [1, 1]} : vector<8x128xf32> to vector<8x32xf32>
    %174 = vector.extract_strided_slice %172 {offsets = [0, 64], sizes = [8, 32], strides = [1, 1]} : vector<8x128xf32> to vector<8x32xf32>
    %175 = vector.extract_strided_slice %171 {offsets = [0, 96], sizes = [8, 32], strides = [1, 1]} : vector<8x128xf32> to vector<8x32xf32>
    %176 = arith.mulf %173, %174 : vector<8x32xf32>
    %177 = math.tanh %176 : vector<8x32xf32>
    %178 = arith.mulf %175, %177 : vector<8x32xf32>
    %179 = arith.truncf %39 : vector<8x32xf32> to vector<8x32xbf16>
    %cst_36 = arith.constant dense<0.000000e+00> : vector<8x128xf32>
    %180 = tpu.matmul %179, %161, %cst_36 {dimension_numbers = #tpu.dot_dimension_numbers<[1], [0], [0], [1], [0, 0, 1, 1], [], []>} : vector<8x32xbf16>, vector<32x128xbf16>, vector<8x128xf32> -> vector<8x128xf32>
    %181 = vector.broadcast %162 : vector<1x128xf32> to vector<8x128xf32>
    %182 = arith.addf %180, %181 : vector<8x128xf32>
    %183 = arith.truncf %178 : vector<8x32xf32> to vector<8x32xbf16>
    %cst_37 = arith.constant dense<0.000000e+00> : vector<8x128xf32>
    %184 = tpu.matmul %183, %160, %cst_37 {dimension_numbers = #tpu.dot_dimension_numbers<[1], [0], [0], [1], [0, 0, 1, 1], [], []>} : vector<8x32xbf16>, vector<32x128xbf16>, vector<8x128xf32> -> vector<8x128xf32>
    %185 = arith.addf %184, %182 : vector<8x128xf32>
    %186 = arith.negf %185 : vector<8x128xf32>
    %187 = math.exp %186 : vector<8x128xf32>
    %cst_38 = arith.constant 1.000000e+00 : f32
    %188 = vector.broadcast %cst_38 : f32 to vector<8x128xf32>
    %189 = arith.addf %188, %187 : vector<8x128xf32>
    %190 = arith.divf %188, %189 : vector<8x128xf32>
    %191 = math.tanh %185 : vector<8x128xf32>
    %192 = vector.extract_strided_slice %190 {offsets = [0, 0], sizes = [8, 32], strides = [1, 1]} : vector<8x128xf32> to vector<8x32xf32>
    %193 = vector.extract_strided_slice %190 {offsets = [0, 32], sizes = [8, 32], strides = [1, 1]} : vector<8x128xf32> to vector<8x32xf32>
    %194 = vector.extract_strided_slice %191 {offsets = [0, 64], sizes = [8, 32], strides = [1, 1]} : vector<8x128xf32> to vector<8x32xf32>
    %195 = vector.extract_strided_slice %190 {offsets = [0, 96], sizes = [8, 32], strides = [1, 1]} : vector<8x128xf32> to vector<8x32xf32>
    %196 = arith.mulf %193, %176 : vector<8x32xf32>
    %197 = arith.mulf %192, %194 : vector<8x32xf32>
    %198 = arith.addf %196, %197 : vector<8x32xf32>
    %199 = math.tanh %198 : vector<8x32xf32>
    %200 = arith.mulf %195, %199 : vector<8x32xf32>
    %201 = arith.truncf %58 : vector<8x32xf32> to vector<8x32xbf16>
    %cst_39 = arith.constant dense<0.000000e+00> : vector<8x128xf32>
    %202 = tpu.matmul %201, %161, %cst_39 {dimension_numbers = #tpu.dot_dimension_numbers<[1], [0], [0], [1], [0, 0, 1, 1], [], []>} : vector<8x32xbf16>, vector<32x128xbf16>, vector<8x128xf32> -> vector<8x128xf32>
    %203 = vector.broadcast %162 : vector<1x128xf32> to vector<8x128xf32>
    %204 = arith.addf %202, %203 : vector<8x128xf32>
    %205 = arith.truncf %200 : vector<8x32xf32> to vector<8x32xbf16>
    %cst_40 = arith.constant dense<0.000000e+00> : vector<8x128xf32>
    %206 = tpu.matmul %205, %160, %cst_40 {dimension_numbers = #tpu.dot_dimension_numbers<[1], [0], [0], [1], [0, 0, 1, 1], [], []>} : vector<8x32xbf16>, vector<32x128xbf16>, vector<8x128xf32> -> vector<8x128xf32>
    %207 = arith.addf %206, %204 : vector<8x128xf32>
    %208 = arith.negf %207 : vector<8x128xf32>
    %209 = math.exp %208 : vector<8x128xf32>
    %cst_41 = arith.constant 1.000000e+00 : f32
    %210 = vector.broadcast %cst_41 : f32 to vector<8x128xf32>
    %211 = arith.addf %210, %209 : vector<8x128xf32>
    %212 = arith.divf %210, %211 : vector<8x128xf32>
    %213 = math.tanh %207 : vector<8x128xf32>
    %214 = vector.extract_strided_slice %212 {offsets = [0, 0], sizes = [8, 32], strides = [1, 1]} : vector<8x128xf32> to vector<8x32xf32>
    %215 = vector.extract_strided_slice %212 {offsets = [0, 32], sizes = [8, 32], strides = [1, 1]} : vector<8x128xf32> to vector<8x32xf32>
    %216 = vector.extract_strided_slice %213 {offsets = [0, 64], sizes = [8, 32], strides = [1, 1]} : vector<8x128xf32> to vector<8x32xf32>
    %217 = vector.extract_strided_slice %212 {offsets = [0, 96], sizes = [8, 32], strides = [1, 1]} : vector<8x128xf32> to vector<8x32xf32>
    %218 = arith.mulf %215, %198 : vector<8x32xf32>
    %219 = arith.mulf %214, %216 : vector<8x32xf32>
    %220 = arith.addf %218, %219 : vector<8x32xf32>
    %221 = math.tanh %220 : vector<8x32xf32>
    %222 = arith.mulf %217, %221 : vector<8x32xf32>
    %223 = arith.truncf %77 : vector<8x32xf32> to vector<8x32xbf16>
    %cst_42 = arith.constant dense<0.000000e+00> : vector<8x128xf32>
    %224 = tpu.matmul %223, %161, %cst_42 {dimension_numbers = #tpu.dot_dimension_numbers<[1], [0], [0], [1], [0, 0, 1, 1], [], []>} : vector<8x32xbf16>, vector<32x128xbf16>, vector<8x128xf32> -> vector<8x128xf32>
    %225 = vector.broadcast %162 : vector<1x128xf32> to vector<8x128xf32>
    %226 = arith.addf %224, %225 : vector<8x128xf32>
    %227 = arith.truncf %222 : vector<8x32xf32> to vector<8x32xbf16>
    %cst_43 = arith.constant dense<0.000000e+00> : vector<8x128xf32>
    %228 = tpu.matmul %227, %160, %cst_43 {dimension_numbers = #tpu.dot_dimension_numbers<[1], [0], [0], [1], [0, 0, 1, 1], [], []>} : vector<8x32xbf16>, vector<32x128xbf16>, vector<8x128xf32> -> vector<8x128xf32>
    %229 = arith.addf %228, %226 : vector<8x128xf32>
    %230 = arith.negf %229 : vector<8x128xf32>
    %231 = math.exp %230 : vector<8x128xf32>
    %cst_44 = arith.constant 1.000000e+00 : f32
    %232 = vector.broadcast %cst_44 : f32 to vector<8x128xf32>
    %233 = arith.addf %232, %231 : vector<8x128xf32>
    %234 = arith.divf %232, %233 : vector<8x128xf32>
    %235 = math.tanh %229 : vector<8x128xf32>
    %236 = vector.extract_strided_slice %234 {offsets = [0, 0], sizes = [8, 32], strides = [1, 1]} : vector<8x128xf32> to vector<8x32xf32>
    %237 = vector.extract_strided_slice %234 {offsets = [0, 32], sizes = [8, 32], strides = [1, 1]} : vector<8x128xf32> to vector<8x32xf32>
    %238 = vector.extract_strided_slice %235 {offsets = [0, 64], sizes = [8, 32], strides = [1, 1]} : vector<8x128xf32> to vector<8x32xf32>
    %239 = vector.extract_strided_slice %234 {offsets = [0, 96], sizes = [8, 32], strides = [1, 1]} : vector<8x128xf32> to vector<8x32xf32>
    %240 = arith.mulf %237, %220 : vector<8x32xf32>
    %241 = arith.mulf %236, %238 : vector<8x32xf32>
    %242 = arith.addf %240, %241 : vector<8x32xf32>
    %243 = math.tanh %242 : vector<8x32xf32>
    %244 = arith.mulf %239, %243 : vector<8x32xf32>
    %245 = arith.truncf %96 : vector<8x32xf32> to vector<8x32xbf16>
    %cst_45 = arith.constant dense<0.000000e+00> : vector<8x128xf32>
    %246 = tpu.matmul %245, %161, %cst_45 {dimension_numbers = #tpu.dot_dimension_numbers<[1], [0], [0], [1], [0, 0, 1, 1], [], []>} : vector<8x32xbf16>, vector<32x128xbf16>, vector<8x128xf32> -> vector<8x128xf32>
    %247 = vector.broadcast %162 : vector<1x128xf32> to vector<8x128xf32>
    %248 = arith.addf %246, %247 : vector<8x128xf32>
    %249 = arith.truncf %244 : vector<8x32xf32> to vector<8x32xbf16>
    %cst_46 = arith.constant dense<0.000000e+00> : vector<8x128xf32>
    %250 = tpu.matmul %249, %160, %cst_46 {dimension_numbers = #tpu.dot_dimension_numbers<[1], [0], [0], [1], [0, 0, 1, 1], [], []>} : vector<8x32xbf16>, vector<32x128xbf16>, vector<8x128xf32> -> vector<8x128xf32>
    %251 = arith.addf %250, %248 : vector<8x128xf32>
    %252 = arith.negf %251 : vector<8x128xf32>
    %253 = math.exp %252 : vector<8x128xf32>
    %cst_47 = arith.constant 1.000000e+00 : f32
    %254 = vector.broadcast %cst_47 : f32 to vector<8x128xf32>
    %255 = arith.addf %254, %253 : vector<8x128xf32>
    %256 = arith.divf %254, %255 : vector<8x128xf32>
    %257 = math.tanh %251 : vector<8x128xf32>
    %258 = vector.extract_strided_slice %256 {offsets = [0, 0], sizes = [8, 32], strides = [1, 1]} : vector<8x128xf32> to vector<8x32xf32>
    %259 = vector.extract_strided_slice %256 {offsets = [0, 32], sizes = [8, 32], strides = [1, 1]} : vector<8x128xf32> to vector<8x32xf32>
    %260 = vector.extract_strided_slice %257 {offsets = [0, 64], sizes = [8, 32], strides = [1, 1]} : vector<8x128xf32> to vector<8x32xf32>
    %261 = vector.extract_strided_slice %256 {offsets = [0, 96], sizes = [8, 32], strides = [1, 1]} : vector<8x128xf32> to vector<8x32xf32>
    %262 = arith.mulf %259, %242 : vector<8x32xf32>
    %263 = arith.mulf %258, %260 : vector<8x32xf32>
    %264 = arith.addf %262, %263 : vector<8x32xf32>
    %265 = math.tanh %264 : vector<8x32xf32>
    %266 = arith.mulf %261, %265 : vector<8x32xf32>
    %267 = arith.truncf %115 : vector<8x32xf32> to vector<8x32xbf16>
    %cst_48 = arith.constant dense<0.000000e+00> : vector<8x128xf32>
    %268 = tpu.matmul %267, %161, %cst_48 {dimension_numbers = #tpu.dot_dimension_numbers<[1], [0], [0], [1], [0, 0, 1, 1], [], []>} : vector<8x32xbf16>, vector<32x128xbf16>, vector<8x128xf32> -> vector<8x128xf32>
    %269 = vector.broadcast %162 : vector<1x128xf32> to vector<8x128xf32>
    %270 = arith.addf %268, %269 : vector<8x128xf32>
    %271 = arith.truncf %266 : vector<8x32xf32> to vector<8x32xbf16>
    %cst_49 = arith.constant dense<0.000000e+00> : vector<8x128xf32>
    %272 = tpu.matmul %271, %160, %cst_49 {dimension_numbers = #tpu.dot_dimension_numbers<[1], [0], [0], [1], [0, 0, 1, 1], [], []>} : vector<8x32xbf16>, vector<32x128xbf16>, vector<8x128xf32> -> vector<8x128xf32>
    %273 = arith.addf %272, %270 : vector<8x128xf32>
    %274 = arith.negf %273 : vector<8x128xf32>
    %275 = math.exp %274 : vector<8x128xf32>
    %cst_50 = arith.constant 1.000000e+00 : f32
    %276 = vector.broadcast %cst_50 : f32 to vector<8x128xf32>
    %277 = arith.addf %276, %275 : vector<8x128xf32>
    %278 = arith.divf %276, %277 : vector<8x128xf32>
    %279 = math.tanh %273 : vector<8x128xf32>
    %280 = vector.extract_strided_slice %278 {offsets = [0, 0], sizes = [8, 32], strides = [1, 1]} : vector<8x128xf32> to vector<8x32xf32>
    %281 = vector.extract_strided_slice %278 {offsets = [0, 32], sizes = [8, 32], strides = [1, 1]} : vector<8x128xf32> to vector<8x32xf32>
    %282 = vector.extract_strided_slice %279 {offsets = [0, 64], sizes = [8, 32], strides = [1, 1]} : vector<8x128xf32> to vector<8x32xf32>
    %283 = vector.extract_strided_slice %278 {offsets = [0, 96], sizes = [8, 32], strides = [1, 1]} : vector<8x128xf32> to vector<8x32xf32>
    %284 = arith.mulf %281, %264 : vector<8x32xf32>
    %285 = arith.mulf %280, %282 : vector<8x32xf32>
    %286 = arith.addf %284, %285 : vector<8x32xf32>
    %287 = math.tanh %286 : vector<8x32xf32>
    %288 = arith.mulf %283, %287 : vector<8x32xf32>
    %289 = arith.truncf %134 : vector<8x32xf32> to vector<8x32xbf16>
    %cst_51 = arith.constant dense<0.000000e+00> : vector<8x128xf32>
    %290 = tpu.matmul %289, %161, %cst_51 {dimension_numbers = #tpu.dot_dimension_numbers<[1], [0], [0], [1], [0, 0, 1, 1], [], []>} : vector<8x32xbf16>, vector<32x128xbf16>, vector<8x128xf32> -> vector<8x128xf32>
    %291 = vector.broadcast %162 : vector<1x128xf32> to vector<8x128xf32>
    %292 = arith.addf %290, %291 : vector<8x128xf32>
    %293 = arith.truncf %288 : vector<8x32xf32> to vector<8x32xbf16>
    %cst_52 = arith.constant dense<0.000000e+00> : vector<8x128xf32>
    %294 = tpu.matmul %293, %160, %cst_52 {dimension_numbers = #tpu.dot_dimension_numbers<[1], [0], [0], [1], [0, 0, 1, 1], [], []>} : vector<8x32xbf16>, vector<32x128xbf16>, vector<8x128xf32> -> vector<8x128xf32>
    %295 = arith.addf %294, %292 : vector<8x128xf32>
    %296 = arith.negf %295 : vector<8x128xf32>
    %297 = math.exp %296 : vector<8x128xf32>
    %cst_53 = arith.constant 1.000000e+00 : f32
    %298 = vector.broadcast %cst_53 : f32 to vector<8x128xf32>
    %299 = arith.addf %298, %297 : vector<8x128xf32>
    %300 = arith.divf %298, %299 : vector<8x128xf32>
    %301 = math.tanh %295 : vector<8x128xf32>
    %302 = vector.extract_strided_slice %300 {offsets = [0, 0], sizes = [8, 32], strides = [1, 1]} : vector<8x128xf32> to vector<8x32xf32>
    %303 = vector.extract_strided_slice %300 {offsets = [0, 32], sizes = [8, 32], strides = [1, 1]} : vector<8x128xf32> to vector<8x32xf32>
    %304 = vector.extract_strided_slice %301 {offsets = [0, 64], sizes = [8, 32], strides = [1, 1]} : vector<8x128xf32> to vector<8x32xf32>
    %305 = vector.extract_strided_slice %300 {offsets = [0, 96], sizes = [8, 32], strides = [1, 1]} : vector<8x128xf32> to vector<8x32xf32>
    %306 = arith.mulf %303, %286 : vector<8x32xf32>
    %307 = arith.mulf %302, %304 : vector<8x32xf32>
    %308 = arith.addf %306, %307 : vector<8x32xf32>
    %309 = math.tanh %308 : vector<8x32xf32>
    %310 = arith.mulf %305, %309 : vector<8x32xf32>
    %311 = arith.truncf %153 : vector<8x32xf32> to vector<8x32xbf16>
    %cst_54 = arith.constant dense<0.000000e+00> : vector<8x128xf32>
    %312 = tpu.matmul %311, %161, %cst_54 {dimension_numbers = #tpu.dot_dimension_numbers<[1], [0], [0], [1], [0, 0, 1, 1], [], []>} : vector<8x32xbf16>, vector<32x128xbf16>, vector<8x128xf32> -> vector<8x128xf32>
    %313 = vector.broadcast %162 : vector<1x128xf32> to vector<8x128xf32>
    %314 = arith.addf %312, %313 : vector<8x128xf32>
    %315 = arith.truncf %310 : vector<8x32xf32> to vector<8x32xbf16>
    %cst_55 = arith.constant dense<0.000000e+00> : vector<8x128xf32>
    %316 = tpu.matmul %315, %160, %cst_55 {dimension_numbers = #tpu.dot_dimension_numbers<[1], [0], [0], [1], [0, 0, 1, 1], [], []>} : vector<8x32xbf16>, vector<32x128xbf16>, vector<8x128xf32> -> vector<8x128xf32>
    %317 = arith.addf %316, %314 : vector<8x128xf32>
    %318 = arith.negf %317 : vector<8x128xf32>
    %319 = math.exp %318 : vector<8x128xf32>
    %cst_56 = arith.constant 1.000000e+00 : f32
    %320 = vector.broadcast %cst_56 : f32 to vector<8x128xf32>
    %321 = arith.addf %320, %319 : vector<8x128xf32>
    %322 = arith.divf %320, %321 : vector<8x128xf32>
    %323 = math.tanh %317 : vector<8x128xf32>
    %324 = vector.extract_strided_slice %322 {offsets = [0, 0], sizes = [8, 32], strides = [1, 1]} : vector<8x128xf32> to vector<8x32xf32>
    %325 = vector.extract_strided_slice %322 {offsets = [0, 32], sizes = [8, 32], strides = [1, 1]} : vector<8x128xf32> to vector<8x32xf32>
    %326 = vector.extract_strided_slice %323 {offsets = [0, 64], sizes = [8, 32], strides = [1, 1]} : vector<8x128xf32> to vector<8x32xf32>
    %327 = vector.extract_strided_slice %322 {offsets = [0, 96], sizes = [8, 32], strides = [1, 1]} : vector<8x128xf32> to vector<8x32xf32>
    %328 = arith.mulf %325, %308 : vector<8x32xf32>
    %329 = arith.mulf %324, %326 : vector<8x32xf32>
    %330 = arith.addf %328, %329 : vector<8x32xf32>
    %331 = math.tanh %330 : vector<8x32xf32>
    %332 = arith.mulf %327, %331 : vector<8x32xf32>
    %c1 = arith.constant 1 : index
    %c0_57 = arith.constant 0 : index
    %c0_58 = arith.constant 0 : index
    %333 = vector.load %arg12[%c1, %c0_57, %c0_58] : memref<2x8x32xf32, #tpu.memory_space<vmem>>, vector<1x8x32xf32>
    %334 = vector.shape_cast %333 : vector<1x8x32xf32> to vector<8x32xf32>
    %335 = vector.shape_cast %332 : vector<8x32xf32> to vector<1x8x32xf32>
    tpu.vector_store %arg12[%c1, %c0_57, %c0_58], %335 {strides = array<i32>} : memref<2x8x32xf32, #tpu.memory_space<vmem>>, vector<1x8x32xf32>,
    %c1_59 = arith.constant 1 : index
    %c0_60 = arith.constant 0 : index
    %c0_61 = arith.constant 0 : index
    %336 = vector.load %arg13[%c1_59, %c0_60, %c0_61] : memref<2x8x32xf32, #tpu.memory_space<vmem>>, vector<1x8x32xf32>
    %337 = vector.shape_cast %336 : vector<1x8x32xf32> to vector<8x32xf32>
    %338 = vector.shape_cast %330 : vector<8x32xf32> to vector<1x8x32xf32>
    tpu.vector_store %arg13[%c1_59, %c0_60, %c0_61], %338 {strides = array<i32>} : memref<2x8x32xf32, #tpu.memory_space<vmem>>, vector<1x8x32xf32>,
    %339 = tpu.concatenate %178, %200, %222, %244, %266, %288, %310, %332 in 0 : vector<8x32xf32>, vector<8x32xf32>, vector<8x32xf32>, vector<8x32xf32>, vector<8x32xf32>, vector<8x32xf32>, vector<8x32xf32>, vector<8x32xf32> -> vector<64x32xf32>
    %340 = arith.truncf %339 : vector<64x32xf32> to vector<64x32xbf16>
    %c0_62 = arith.constant 0 : index
    %c0_63 = arith.constant 0 : index
    %341 = vector.load %arg7[%c0_62, %c0_63] : memref<32x32xbf16, #tpu.memory_space<vmem>>, vector<32x32xbf16>
    %cst_64 = arith.constant dense<0.000000e+00> : vector<64x32xf32>
    %342 = tpu.matmul %340, %341, %cst_64 {dimension_numbers = #tpu.dot_dimension_numbers<[1], [0], [0], [1], [0, 0, 1, 1], [], []>} : vector<64x32xbf16>, vector<32x32xbf16>, vector<64x32xf32> -> vector<64x32xf32>
    %c0_65 = arith.constant 0 : index
    %c0_66 = arith.constant 0 : index
    %343 = vector.load %arg8[%c0_65, %c0_66] : memref<1x32xf32, #tpu.memory_space<vmem>>, vector<1x32xf32>
    %344 = vector.broadcast %343 : vector<1x32xf32> to vector<64x32xf32>
    %345 = arith.addf %342, %344 : vector<64x32xf32>
    %cst_67 = arith.constant 0.000000e+00 : f32
    %346 = vector.broadcast %cst_67 : f32 to vector<64x32xf32>
    %347 = arith.maximumf %345, %346 : vector<64x32xf32>
    %348 = arith.truncf %347 : vector<64x32xf32> to vector<64x32xbf16>
    %c0_68 = arith.constant 0 : index
    %c0_69 = arith.constant 0 : index
    %349 = vector.load %arg9[%c0_68, %c0_69] : memref<32x128xbf16, #tpu.memory_space<vmem>>, vector<32x128xbf16>
    %cst_70 = arith.constant dense<0.000000e+00> : vector<64x128xf32>
    %350 = tpu.matmul %348, %349, %cst_70 {dimension_numbers = #tpu.dot_dimension_numbers<[1], [0], [0], [1], [0, 0, 1, 1], [], []>} : vector<64x32xbf16>, vector<32x128xbf16>, vector<64x128xf32> -> vector<64x128xf32>
    %c0_71 = arith.constant 0 : index
    %c0_72 = arith.constant 0 : index
    %351 = vector.load %arg10[%c0_71, %c0_72] : memref<1x128xf32, #tpu.memory_space<vmem>>, vector<1x128xf32>
    %352 = vector.broadcast %351 : vector<1x128xf32> to vector<64x128xf32>
    %353 = arith.addf %350, %352 : vector<64x128xf32>
    %c0_73 = arith.constant 0 : index
    %c0_74 = arith.constant 0 : index
    %354 = vector.load %arg11[%c0_73, %c0_74] : memref<64x128xf32, #tpu.memory_space<vmem>>, vector<64x128xf32>
    tpu.vector_store %arg11[%c0_73, %c0_74], %353 {strides = array<i32>} : memref<64x128xf32, #tpu.memory_space<vmem>>, vector<64x128xf32>,
    return
  }
}

</mosaic_0001>

<llo_original>
// kernel: tpu_custom_call.1
$region0: #{tpu_custom_call.1}
  #allocation0 [shape = 'u32[]', space=smem, size = 0x4, offset = 0x4, fixed_abs, tag = 'smem constant byte address 0x4 - core index']
  #allocation1 [shape = 'u32[72,128]{1,0:T(1,128)}', space=vmem, size = 0x9000, scoped, tag = 'internal scratch']
  %s0 = inlined_call_operand.vmem [shape: f32[64,32], index: 0, kind: input, shape index: {}]
  %s1 = inlined_call_operand.vmem [shape: bf16[32,128], index: 1, kind: input, shape index: {}]
  %s2 = inlined_call_operand.vmem [shape: bf16[32,128], index: 2, kind: input, shape index: {}]
  %s3 = inlined_call_operand.vmem [shape: f32[1,128], index: 3, kind: input, shape index: {}]
  %s4 = inlined_call_operand.vmem [shape: bf16[32,128], index: 4, kind: input, shape index: {}]
  %s5 = inlined_call_operand.vmem [shape: bf16[32,128], index: 5, kind: input, shape index: {}]
  %s6 = inlined_call_operand.vmem [shape: f32[1,128], index: 6, kind: input, shape index: {}]
  %s7 = inlined_call_operand.vmem [shape: bf16[32,32], index: 7, kind: input, shape index: {}]
  %s8 = inlined_call_operand.vmem [shape: f32[1,32], index: 8, kind: input, shape index: {}]
  %s9 = inlined_call_operand.vmem [shape: bf16[32,128], index: 9, kind: input, shape index: {}]
  %s10 = inlined_call_operand.vmem [shape: f32[1,128], index: 10, kind: input, shape index: {}]
  %s11 = inlined_call_operand.hbm [shape: f32[64,128], index: 11, kind: output, shape index: {0}]
  %s12 = inlined_call_operand.hbm [shape: f32[2,8,32], index: 12, kind: output, shape index: {1}]
  %s13 = inlined_call_operand.hbm [shape: f32[2,8,32], index: 13, kind: output, shape index: {2}]
  %14 = xla_tuple %s11, %s12, %s13
  %s15 = sld [smem:[#allocation0]]
  $region70: #{tpu_custom_call.1} parent=0
    _
  %s17 = ssub.s32 1, %s15
  %s18 = scalar_select 0, %s17, %s15
  $region1: #{tpu_custom_call.1} parent=0
    #allocation2 [shape = 'u8[32768]{0}', space=vmem, size = 0x8000, scoped, tag = 'output window, operand 0, single buffered']
    #allocation3 [shape = 's32[1]{0}', space=sflag, size = 0x4, scoped, tag = 'scoped memory for tpu_custom_call.1']
    #allocation4 [shape = 'u8[8192]{0}', space=vmem, size = 0x2000, scoped, tag = 'output window, operand 1, single buffered']
    #allocation5 [shape = 's32[1]{0}', space=sflag, size = 0x4, scoped, tag = 'scoped memory for tpu_custom_call.1']
    #allocation6 [shape = 'u8[8192]{0}', space=vmem, size = 0x2000, scoped, tag = 'output window, operand 2, single buffered']
    %19 = vsyncpa [#allocation3], 0
    %20 = vsyncpa [#allocation5], 0
    // Predicated region
    $region2: #{tpu_custom_call.1} parent=1 // pred_check
      _
    $region3: #{tpu_custom_call.1} parent=1 // pred_check_branch
      %22 = sbr.rel (0) target = $region5
    $region4: #{tpu_custom_call.1} parent=1 // pred_region
      _
    $region5: #{tpu_custom_call.1} parent=1 // pred_fallthru
      _
    // Predicated region
    $region6: #{tpu_custom_call.1} parent=1 // pred_check
      _
    $region7: #{tpu_custom_call.1} parent=1 // pred_check_branch
      %24 = sbr.rel (0) target = $region9
    $region8: #{tpu_custom_call.1} parent=1 // pred_region
      _
    $region9: #{tpu_custom_call.1} parent=1 // pred_fallthru
      _
    // Predicated region
    $region10: #{tpu_custom_call.1} parent=1 // pred_check
      _
    $region11: #{tpu_custom_call.1} parent=1 // pred_check_branch
      %26 = sbr.rel (0) target = $region13
    $region12: #{tpu_custom_call.1} parent=1 // pred_region
      _
    $region13: #{tpu_custom_call.1} parent=1 // pred_fallthru
      _
    // Predicated region
    $region14: #{tpu_custom_call.1} parent=1 // pred_check
      _
    $region15: #{tpu_custom_call.1} parent=1 // pred_check_branch
      %28 = sbr.rel (0) target = $region17
    $region16: #{tpu_custom_call.1} parent=1 // pred_region
      _
    $region17: #{tpu_custom_call.1} parent=1 // pred_fallthru
      _
    // Predicated region
    $region18: #{tpu_custom_call.1} parent=1 // pred_check
      _
    $region19: #{tpu_custom_call.1} parent=1 // pred_check_branch
      %30 = sbr.rel (0) target = $region21
    $region20: #{tpu_custom_call.1} parent=1 // pred_region
      _
    $region21: #{tpu_custom_call.1} parent=1 // pred_fallthru
      _
    // Predicated region
    $region22: #{tpu_custom_call.1} parent=1 // pred_check
      _
    $region23: #{tpu_custom_call.1} parent=1 // pred_check_branch
      %32 = sbr.rel (0) target = $region25
    $region24: #{tpu_custom_call.1} parent=1 // pred_region
      _
    $region25: #{tpu_custom_call.1} parent=1 // pred_fallthru
      _
    // Predicated region
    $region26: #{tpu_custom_call.1} parent=1 // pred_check
      _
    $region27: #{tpu_custom_call.1} parent=1 // pred_check_branch
      %34 = sbr.rel (0) target = $region29
    $region28: #{tpu_custom_call.1} parent=1 // pred_region
      _
    $region29: #{tpu_custom_call.1} parent=1 // pred_fallthru
      _
    // Predicated region
    $region30: #{tpu_custom_call.1} parent=1 // pred_check
      _
    $region31: #{tpu_custom_call.1} parent=1 // pred_check_branch
      %36 = sbr.rel (0) target = $region33
    $region32: #{tpu_custom_call.1} parent=1 // pred_region
      _
    $region33: #{tpu_custom_call.1} parent=1 // pred_fallthru
      _
    // Predicated region
    $region34: #{tpu_custom_call.1} parent=1 // pred_check
      _
    $region35: #{tpu_custom_call.1} parent=1 // pred_check_branch
      %38 = sbr.rel (0) target = $region37
    $region36: #{tpu_custom_call.1} parent=1 // pred_region
      _
    $region37: #{tpu_custom_call.1} parent=1 // pred_fallthru
      _
    // Predicated region
    $region38: #{tpu_custom_call.1} parent=1 // pred_check
      _
    $region39: #{tpu_custom_call.1} parent=1 // pred_check_branch
      %40 = sbr.rel (0) target = $region41
    $region40: #{tpu_custom_call.1} parent=1 // pred_region
      _
    $region41: #{tpu_custom_call.1} parent=1 // pred_fallthru
      _
    // Predicated region
    $region42: #{tpu_custom_call.1} parent=1 // pred_check
      _
    $region43: #{tpu_custom_call.1} parent=1 // pred_check_branch
      %42 = sbr.rel (0) target = $region45
    $region44: #{tpu_custom_call.1} parent=1 // pred_region
      _
    $region45: #{tpu_custom_call.1} parent=1 // pred_fallthru
      _
    %v44 = vld [vmem:[%s0] sm:$0xff]
    %v45 = vld [vmem:[%s0 + $0x8] sm:$0xff]
    %v46 = vld [vmem:[%s0 + $0x10] sm:$0xff]
    %v47 = vld [vmem:[%s0 + $0x18] sm:$0xff]
    %v48 = vld [vmem:[%s0 + $0x20] sm:$0xff]
    %v49 = vld [vmem:[%s0 + $0x28] sm:$0xff]
    %v50 = vld [vmem:[%s0 + $0x30] sm:$0xff]
    %v51 = vld [vmem:[%s0 + $0x38] sm:$0xff]
    %v52 = vpack.c.bf16 %v45, %v44
    %v53 = vpack.c.bf16 %v47, %v46
    %v54 = vpack.c.bf16 %v49, %v48
    %v55 = vpack.c.bf16 %v51, %v50
    %v56 = vld [vmem:[%s1] sm:$0xf]
    %v57 = vld [vmem:[%s1 + $0x4] sm:$0xf]
    %v58 = vld [vmem:[%s1 + $0x8] sm:$0xf]
    %v59 = vld [vmem:[%s1 + $0xc] sm:$0xf]
    %v60 = vld [vmem:[%s3] sm:$0x1]
    %v62 = vperm.slane %v60, 0
    %v68 = vunpack.c.l.b16 %v56
    %v69 = vunpack.c.l.b16 %v57
    %v70 = vunpack.c.l.b16 %v58
    %v71 = vunpack.c.l.b16 %v59
    %v72 = vpack.c.b16 %v69, %v68
    %v73 = vpack.c.b16 %v71, %v70
    %vm76 = vcmask 261120
    %v78 = vsel %vm76, %v52, 0
    %v81 = vsel %vm76, %v53, 0
    %v84 = vsel %vm76, %v54, 0
    %v87 = vsel %vm76, %v55, 0
    %89 = vmatpush.bf16.msra.mxu0 0
    %90 = vmatpush.bf16.msra.mxu0 0
    %91 = vmatpush.bf16.msra.mxu0 0
    %92 = vmatpush.bf16.msra.mxu0 0
    %93 = vmatpush.bf16.msra.mxu0 0
    %94 = vmatpush.bf16.msra.mxu0 0
    %95 = vmatpush.bf16.msra.mxu0 %v73
    %96 = vmatpush.bf16.msra.mxu0 %v72
    %97 = vmatmul.bf16.gmra.mxu0 %v78
    %v98 = vpop.f32.mrf.mxu0
    %v99 = vadd.f32 %v62, %v98
    %v100 = vpop.f32.mrf.mxu0
    %v101 = vadd.f32 %v62, %v100
    %102 = vmatmul.bf16.gmra.mxu0 %v81
    %v103 = vpop.f32.mrf.mxu0
    %v104 = vadd.f32 %v62, %v103
    %v105 = vpop.f32.mrf.mxu0
    %v106 = vadd.f32 %v62, %v105
    %107 = vmatmul.bf16.gmra.mxu0 %v84
    %v108 = vpop.f32.mrf.mxu0
    %v109 = vadd.f32 %v62, %v108
    %v110 = vpop.f32.mrf.mxu0
    %v111 = vadd.f32 %v62, %v110
    %112 = vmatmul.bf16.gmra.mxu0 %v87
    %v113 = vpop.f32.mrf.mxu0
    %v114 = vadd.f32 %v62, %v113
    %v115 = vpop.f32.mrf.mxu0
    %v116 = vadd.f32 %v62, %v115
    %117 = vdwg.mxu0
    %v118 = vld [vmem:[%s2] sm:$0xf]
    %v119 = vld [vmem:[%s2 + $0x4] sm:$0xf]
    %v120 = vld [vmem:[%s2 + $0x8] sm:$0xf]
    %v121 = vld [vmem:[%s2 + $0xc] sm:$0xf]
    %v122 = vxor.u32 %v99, 2147483648
    %v123 = vmul.f32 %v122, 1.442695
    %v124 = vpow.pop %v123
    %v125 = vadd.f32 %v124, 1.0
    %v126 = vrcp.pop %v125
    %v127 = vmul.f32 %v125, %v126
    %v128 = vsub.f32 1.0, %v127
    %v129 = vmul.f32 %v126, %v128
    %v130 = vadd.f32 %v126, %v129
    %vm131 = vweird.f32 %v125
    %vm132 = vweird.f32 %v126
    %vm133 = vmor %vm131, %vm132
    %v134 = vsel %vm133, %v126, %v130
    %v135 = vand.u32 2147483647, %v125
    %vm136 = vcmp.eq.f32.partialorder %v135, 8.507059e+37
    %v137 = vand.u32 %v125, 2147483648
    %v138 = vor.u32 1.1754944e-38, %v137
    %v139 = vsel %vm136, %v138, %v134
    %v140 = vmul.f32 1.0, %v139
    %v141 = vtanh.pop %v99
    %143 = vrot.lane.b32.xlu0 %v141, 64
    %v144 = vpop.permute.xlu0 %143
    %v146 = vmul.f32 %v140, %v144
    %v147 = vtanh.pop %v146
    %149 = vrot.lane.b32.xlu0 %v147, 96
    %v150 = vpop.permute.xlu0 %149
    %v152 = vmul.f32 %v140, %v150
    %v153 = vpack.c.bf16 %v152, %v152
    %155 = vrot.lane.b32.xlu0 %v153, 32
    %v156 = vpop.permute.xlu0 %155
    %v161 = vunpack.c.l.b16 %v118
    %v162 = vunpack.c.l.b16 %v119
    %v163 = vunpack.c.l.b16 %v120
    %v164 = vunpack.c.l.b16 %v121
    %v165 = vpack.c.b16 %v162, %v161
    %v166 = vpack.c.b16 %v164, %v163
    %v170 = vsel %vm76, %v156, 0
    %172 = vmatpush.bf16.msra.mxu0 0
    %173 = vmatpush.bf16.msra.mxu0 0
    %174 = vmatpush.bf16.msra.mxu0 0
    %175 = vmatpush.bf16.msra.mxu0 0
    %176 = vmatpush.bf16.msra.mxu0 0
    %177 = vmatpush.bf16.msra.mxu0 0
    %178 = vmatpush.bf16.msra.mxu0 %v166
    %179 = vmatpush.bf16.msra.mxu0 %v165
    %180 = vmatmul.bf16.gmra.mxu0 %v170
    %v181 = vpop.f32.mrf.mxu0
    %v182 = vadd.f32 %v101, %v181
    %v183 = vpop.f32.mrf.mxu0
    %184 = vdwg.mxu0
    %v185 = vxor.u32 %v182, 2147483648
    %v186 = vmul.f32 %v185, 1.442695
    %v187 = vpow.pop %v186
    %v188 = vadd.f32 %v187, 1.0
    %v189 = vrcp.pop %v188
    %v190 = vmul.f32 %v188, %v189
    %v191 = vsub.f32 1.0, %v190
    %v192 = vmul.f32 %v189, %v191
    %v193 = vadd.f32 %v189, %v192
    %vm194 = vweird.f32 %v188
    %vm195 = vweird.f32 %v189
    %vm196 = vmor %vm194, %vm195
    %v197 = vsel %vm196, %v189, %v193
    %v198 = vand.u32 2147483647, %v188
    %vm199 = vcmp.eq.f32.partialorder %v198, 8.507059e+37
    %v200 = vand.u32 %v188, 2147483648
    %v201 = vor.u32 1.1754944e-38, %v200
    %v202 = vsel %vm199, %v201, %v197
    %v203 = vmul.f32 1.0, %v202
    %v204 = vtanh.pop %v182
    %206 = vrot.lane.b32.xlu0 %v146, 32
    %v207 = vpop.permute.xlu0 %206
    %v209 = vmul.f32 %v203, %v207
    %211 = vrot.lane.b32.xlu0 %v204, 64
    %v212 = vpop.permute.xlu0 %211
    %v214 = vmul.f32 %v203, %v212
    %216 = vrot.lane.b32.xlu0 %v214, 32
    %v217 = vpop.permute.xlu0 %216
    %v219 = vadd.f32 %v209, %v217
    %v220 = vtanh.pop %v219
    %222 = vrot.lane.b32.xlu0 %v220, 64
    %v223 = vpop.permute.xlu0 %222
    %v225 = vmul.f32 %v203, %v223
    %v226 = vpack.c.bf16 %v225, %v225
    %228 = vrot.lane.b32.xlu0 %v226, 32
    %v229 = vpop.permute.xlu0 %228
    %v231 = vsel %vm76, %v229, 0
    %233 = vmatpush.bf16.msra.mxu0 0
    %234 = vmatpush.bf16.msra.mxu0 0
    %235 = vmatpush.bf16.msra.mxu0 0
    %236 = vmatpush.bf16.msra.mxu0 0
    %237 = vmatpush.bf16.msra.mxu0 0
    %238 = vmatpush.bf16.msra.mxu0 0
    %239 = vmatpush.bf16.msra.mxu0 %v166
    %240 = vmatpush.bf16.msra.mxu0 %v165
    %241 = vmatmul.bf16.gmra.mxu0 %v231
    %v242 = vpop.f32.mrf.mxu0
    %v243 = vadd.f32 %v104, %v242
    %v244 = vpop.f32.mrf.mxu0
    %245 = vdwg.mxu0
    %v246 = vxor.u32 %v243, 2147483648
    %v247 = vmul.f32 %v246, 1.442695
    %v248 = vpow.pop %v247
    %v249 = vadd.f32 %v248, 1.0
    %v250 = vrcp.pop %v249
    %v251 = vmul.f32 %v249, %v250
    %v252 = vsub.f32 1.0, %v251
    %v253 = vmul.f32 %v250, %v252
    %v254 = vadd.f32 %v250, %v253
    %vm255 = vweird.f32 %v249
    %vm256 = vweird.f32 %v250
    %vm257 = vmor %vm255, %vm256
    %v258 = vsel %vm257, %v250, %v254
    %v259 = vand.u32 2147483647, %v249
    %vm260 = vcmp.eq.f32.partialorder %v259, 8.507059e+37
    %v261 = vand.u32 %v249, 2147483648
    %v262 = vor.u32 1.1754944e-38, %v261
    %v263 = vsel %vm260, %v262, %v258
    %v264 = vmul.f32 1.0, %v263
    %v265 = vtanh.pop %v243
    %v266 = vmul.f32 %v264, %v219
    %268 = vrot.lane.b32.xlu0 %v265, 64
    %v269 = vpop.permute.xlu0 %268
    %v271 = vmul.f32 %v264, %v269
    %273 = vrot.lane.b32.xlu0 %v271, 32
    %v274 = vpop.permute.xlu0 %273
    %v276 = vadd.f32 %v266, %v274
    %v277 = vtanh.pop %v276
    %279 = vrot.lane.b32.xlu0 %v277, 64
    %v280 = vpop.permute.xlu0 %279
    %v282 = vmul.f32 %v264, %v280
    %v283 = vpack.c.bf16 %v282, %v282
    %285 = vrot.lane.b32.xlu0 %v283, 32
    %v286 = vpop.permute.xlu0 %285
    %v288 = vsel %vm76, %v286, 0
    %290 = vmatpush.bf16.msra.mxu0 0
    %291 = vmatpush.bf16.msra.mxu0 0
    %292 = vmatpush.bf16.msra.mxu0 0
    %293 = vmatpush.bf16.msra.mxu0 0
    %294 = vmatpush.bf16.msra.mxu0 0
    %295 = vmatpush.bf16.msra.mxu0 0
    %296 = vmatpush.bf16.msra.mxu0 %v166
    %297 = vmatpush.bf16.msra.mxu0 %v165
    %298 = vmatmul.bf16.gmra.mxu0 %v288
    %v299 = vpop.f32.mrf.mxu0
    %v300 = vadd.f32 %v106, %v299
    %v301 = vpop.f32.mrf.mxu0
    %302 = vdwg.mxu0
    %v303 = vxor.u32 %v300, 2147483648
    %v304 = vmul.f32 %v303, 1.442695
    %v305 = vpow.pop %v304
    %v306 = vadd.f32 %v305, 1.0
    %v307 = vrcp.pop %v306
    %v308 = vmul.f32 %v306, %v307
    %v309 = vsub.f32 1.0, %v308
    %v310 = vmul.f32 %v307, %v309
    %v311 = vadd.f32 %v307, %v310
    %vm312 = vweird.f32 %v306
    %vm313 = vweird.f32 %v307
    %vm314 = vmor %vm312, %vm313
    %v315 = vsel %vm314, %v307, %v311
    %v316 = vand.u32 2147483647, %v306
    %vm317 = vcmp.eq.f32.partialorder %v316, 8.507059e+37
    %v318 = vand.u32 %v306, 2147483648
    %v319 = vor.u32 1.1754944e-38, %v318
    %v320 = vsel %vm317, %v319, %v315
    %v321 = vmul.f32 1.0, %v320
    %v322 = vtanh.pop %v300
    %v323 = vmul.f32 %v321, %v276
    %325 = vrot.lane.b32.xlu0 %v322, 64
    %v326 = vpop.permute.xlu0 %325
    %v328 = vmul.f32 %v321, %v326
    %330 = vrot.lane.b32.xlu0 %v328, 32
    %v331 = vpop.permute.xlu0 %330
    %v333 = vadd.f32 %v323, %v331
    %v334 = vtanh.pop %v333
    %336 = vrot.lane.b32.xlu0 %v334, 64
    %v337 = vpop.permute.xlu0 %336
    %v339 = vmul.f32 %v321, %v337
    %v340 = vpack.c.bf16 %v339, %v339
    %342 = vrot.lane.b32.xlu0 %v340, 32
    %v343 = vpop.permute.xlu0 %342
    %v345 = vsel %vm76, %v343, 0
    %347 = vmatpush.bf16.msra.mxu0 0
    %348 = vmatpush.bf16.msra.mxu0 0
    %349 = vmatpush.bf16.msra.mxu0 0
    %350 = vmatpush.bf16.msra.mxu0 0
    %351 = vmatpush.bf16.msra.mxu0 0
    %352 = vmatpush.bf16.msra.mxu0 0
    %353 = vmatpush.bf16.msra.mxu0 %v166
    %354 = vmatpush.bf16.msra.mxu0 %v165
    %355 = vmatmul.bf16.gmra.mxu0 %v345
    %v356 = vpop.f32.mrf.mxu0
    %v357 = vadd.f32 %v109, %v356
    %v358 = vpop.f32.mrf.mxu0
    %359 = vdwg.mxu0
    %v360 = vxor.u32 %v357, 2147483648
    %v361 = vmul.f32 %v360, 1.442695
    %v362 = vpow.pop %v361
    %v363 = vadd.f32 %v362, 1.0
    %v364 = vrcp.pop %v363
    %v365 = vmul.f32 %v363, %v364
    %v366 = vsub.f32 1.0, %v365
    %v367 = vmul.f32 %v364, %v366
    %v368 = vadd.f32 %v364, %v367
    %vm369 = vweird.f32 %v363
    %vm370 = vweird.f32 %v364
    %vm371 = vmor %vm369, %vm370
    %v372 = vsel %vm371, %v364, %v368
    %v373 = vand.u32 2147483647, %v363
    %vm374 = vcmp.eq.f32.partialorder %v373, 8.507059e+37
    %v375 = vand.u32 %v363, 2147483648
    %v376 = vor.u32 1.1754944e-38, %v375
    %v377 = vsel %vm374, %v376, %v372
    %v378 = vmul.f32 1.0, %v377
    %v379 = vtanh.pop %v357
    %v380 = vmul.f32 %v378, %v333
    %382 = vrot.lane.b32.xlu0 %v379, 64
    %v383 = vpop.permute.xlu0 %382
    %v385 = vmul.f32 %v378, %v383
    %387 = vrot.lane.b32.xlu0 %v385, 32
    %v388 = vpop.permute.xlu0 %387
    %v390 = vadd.f32 %v380, %v388
    %v391 = vtanh.pop %v390
    %393 = vrot.lane.b32.xlu0 %v391, 64
    %v394 = vpop.permute.xlu0 %393
    %v396 = vmul.f32 %v378, %v394
    %v397 = vpack.c.bf16 %v396, %v396
    %399 = vrot.lane.b32.xlu0 %v397, 32
    %v400 = vpop.permute.xlu0 %399
    %v402 = vsel %vm76, %v400, 0
    %404 = vmatpush.bf16.msra.mxu0 0
    %405 = vmatpush.bf16.msra.mxu0 0
    %406 = vmatpush.bf16.msra.mxu0 0
    %407 = vmatpush.bf16.msra.mxu0 0
    %408 = vmatpush.bf16.msra.mxu0 0
    %409 = vmatpush.bf16.msra.mxu0 0
    %410 = vmatpush.bf16.msra.mxu0 %v166
    %411 = vmatpush.bf16.msra.mxu0 %v165
    %412 = vmatmul.bf16.gmra.mxu0 %v402
    %v413 = vpop.f32.mrf.mxu0
    %v414 = vadd.f32 %v111, %v413
    %v415 = vpop.f32.mrf.mxu0
    %416 = vdwg.mxu0
    %v417 = vxor.u32 %v414, 2147483648
    %v418 = vmul.f32 %v417, 1.442695
    %v419 = vpow.pop %v418
    %v420 = vadd.f32 %v419, 1.0
    %v421 = vrcp.pop %v420
    %v422 = vmul.f32 %v420, %v421
    %v423 = vsub.f32 1.0, %v422
    %v424 = vmul.f32 %v421, %v423
    %v425 = vadd.f32 %v421, %v424
    %vm426 = vweird.f32 %v420
    %vm427 = vweird.f32 %v421
    %vm428 = vmor %vm426, %vm427
    %v429 = vsel %vm428, %v421, %v425
    %v430 = vand.u32 2147483647, %v420
    %vm431 = vcmp.eq.f32.partialorder %v430, 8.507059e+37
    %v432 = vand.u32 %v420, 2147483648
    %v433 = vor.u32 1.1754944e-38, %v432
    %v434 = vsel %vm431, %v433, %v429
    %v435 = vmul.f32 1.0, %v434
    %v436 = vtanh.pop %v414
    %v437 = vmul.f32 %v435, %v390
    %439 = vrot.lane.b32.xlu0 %v436, 64
    %v440 = vpop.permute.xlu0 %439
    %v442 = vmul.f32 %v435, %v440
    %444 = vrot.lane.b32.xlu0 %v442, 32
    %v445 = vpop.permute.xlu0 %444
    %v447 = vadd.f32 %v437, %v445
    %v448 = vtanh.pop %v447
    %450 = vrot.lane.b32.xlu0 %v448, 64
    %v451 = vpop.permute.xlu0 %450
    %v453 = vmul.f32 %v435, %v451
    %v454 = vpack.c.bf16 %v453, %v453
    %456 = vrot.lane.b32.xlu0 %v454, 32
    %v457 = vpop.permute.xlu0 %456
    %v459 = vsel %vm76, %v457, 0
    %461 = vmatpush.bf16.msra.mxu0 0
    %462 = vmatpush.bf16.msra.mxu0 0
    %463 = vmatpush.bf16.msra.mxu0 0
    %464 = vmatpush.bf16.msra.mxu0 0
    %465 = vmatpush.bf16.msra.mxu0 0
    %466 = vmatpush.bf16.msra.mxu0 0
    %467 = vmatpush.bf16.msra.mxu0 %v166
    %468 = vmatpush.bf16.msra.mxu0 %v165
    %469 = vmatmul.bf16.gmra.mxu0 %v459
    %v470 = vpop.f32.mrf.mxu0
    %v471 = vadd.f32 %v114, %v470
    %v472 = vpop.f32.mrf.mxu0
    %473 = vdwg.mxu0
    %v474 = vxor.u32 %v471, 2147483648
    %v475 = vmul.f32 %v474, 1.442695
    %v476 = vpow.pop %v475
    %v477 = vadd.f32 %v476, 1.0
    %v478 = vrcp.pop %v477
    %v479 = vmul.f32 %v477, %v478
    %v480 = vsub.f32 1.0, %v479
    %v481 = vmul.f32 %v478, %v480
    %v482 = vadd.f32 %v478, %v481
    %vm483 = vweird.f32 %v477
    %vm484 = vweird.f32 %v478
    %vm485 = vmor %vm483, %vm484
    %v486 = vsel %vm485, %v478, %v482
    %v487 = vand.u32 2147483647, %v477
    %vm488 = vcmp.eq.f32.partialorder %v487, 8.507059e+37
    %v489 = vand.u32 %v477, 2147483648
    %v490 = vor.u32 1.1754944e-38, %v489
    %v491 = vsel %vm488, %v490, %v486
    %v492 = vmul.f32 1.0, %v491
    %v493 = vtanh.pop %v471
    %v494 = vmul.f32 %v492, %v447
    %496 = vrot.lane.b32.xlu0 %v493, 64
    %v497 = vpop.permute.xlu0 %496
    %v499 = vmul.f32 %v492, %v497
    %501 = vrot.lane.b32.xlu0 %v499, 32
    %v502 = vpop.permute.xlu0 %501
    %v504 = vadd.f32 %v494, %v502
    %v505 = vtanh.pop %v504
    %507 = vrot.lane.b32.xlu0 %v505, 64
    %v508 = vpop.permute.xlu0 %507
    %v510 = vmul.f32 %v492, %v508
    %v511 = vpack.c.bf16 %v510, %v510
    %513 = vrot.lane.b32.xlu0 %v511, 32
    %v514 = vpop.permute.xlu0 %513
    %v516 = vsel %vm76, %v514, 0
    %518 = vmatpush.bf16.msra.mxu0 0
    %519 = vmatpush.bf16.msra.mxu0 0
    %520 = vmatpush.bf16.msra.mxu0 0
    %521 = vmatpush.bf16.msra.mxu0 0
    %522 = vmatpush.bf16.msra.mxu0 0
    %523 = vmatpush.bf16.msra.mxu0 0
    %524 = vmatpush.bf16.msra.mxu0 %v166
    %525 = vmatpush.bf16.msra.mxu0 %v165
    %526 = vmatmul.bf16.gmra.mxu0 %v516
    %v527 = vpop.f32.mrf.mxu0
    %v528 = vadd.f32 %v116, %v527
    %v529 = vpop.f32.mrf.mxu0
    %530 = vdwg.mxu0
    %v531 = vxor.u32 %v528, 2147483648
    %v532 = vmul.f32 %v531, 1.442695
    %v533 = vpow.pop %v532
    %v534 = vadd.f32 %v533, 1.0
    %v535 = vrcp.pop %v534
    %v536 = vmul.f32 %v534, %v535
    %v537 = vsub.f32 1.0, %v536
    %v538 = vmul.f32 %v535, %v537
    %v539 = vadd.f32 %v535, %v538
    %vm540 = vweird.f32 %v534
    %vm541 = vweird.f32 %v535
    %vm542 = vmor %vm540, %vm541
    %v543 = vsel %vm542, %v535, %v539
    %v544 = vand.u32 2147483647, %v534
    %vm545 = vcmp.eq.f32.partialorder %v544, 8.507059e+37
    %v546 = vand.u32 %v534, 2147483648
    %v547 = vor.u32 1.1754944e-38, %v546
    %v548 = vsel %vm545, %v547, %v543
    %v549 = vmul.f32 1.0, %v548
    %v550 = vtanh.pop %v528
    %v551 = vmul.f32 %v549, %v504
    %553 = vrot.lane.b32.xlu0 %v550, 64
    %v554 = vpop.permute.xlu0 %553
    %v556 = vmul.f32 %v549, %v554
    %558 = vrot.lane.b32.xlu0 %v556, 32
    %v559 = vpop.permute.xlu0 %558
    %v561 = vadd.f32 %v551, %v559
    %v562 = vtanh.pop %v561
    %564 = vrot.lane.b32.xlu0 %v562, 64
    %v565 = vpop.permute.xlu0 %564
    %v567 = vmul.f32 %v549, %v565
    %569 = vrot.lane.b32.xlu0 %v567, 32
    %v570 = vpop.permute.xlu0 %569
    %572 = vst.msk [vmem:[#allocation4] sm:$0xff] %vm76, %v570
    %574 = vrot.lane.b32.xlu0 %v561, 96
    %v575 = vpop.permute.xlu0 %574
    %577 = vst.msk [vmem:[#allocation6] sm:$0xff] %vm76, %v575
    %v578 = vld [vmem:[%s5] sm:$0xf]
    %v579 = vld [vmem:[%s5 + $0x4] sm:$0xf]
    %v580 = vld [vmem:[%s5 + $0x8] sm:$0xf]
    %v581 = vld [vmem:[%s5 + $0xc] sm:$0xf]
    %v582 = vld [vmem:[%s4] sm:$0xf]
    %v583 = vld [vmem:[%s4 + $0x4] sm:$0xf]
    %v584 = vld [vmem:[%s4 + $0x8] sm:$0xf]
    %v585 = vld [vmem:[%s4 + $0xc] sm:$0xf]
    %v586 = vld [vmem:[%s6] sm:$0x1]
    %v588 = vperm.slane %v586, 0
    %v594 = vunpack.c.l.b16 %v582
    %v595 = vunpack.c.l.b16 %v583
    %v596 = vunpack.c.l.b16 %v584
    %v597 = vunpack.c.l.b16 %v585
    %v598 = vpack.c.b16 %v595, %v594
    %v599 = vpack.c.b16 %v597, %v596
    %602 = vmatpush.bf16.msra.mxu0 0
    %603 = vmatpush.bf16.msra.mxu0 0
    %604 = vmatpush.bf16.msra.mxu0 0
    %605 = vmatpush.bf16.msra.mxu0 0
    %606 = vmatpush.bf16.msra.mxu0 0
    %607 = vmatpush.bf16.msra.mxu0 0
    %608 = vmatpush.bf16.msra.mxu0 %v599
    %609 = vmatpush.bf16.msra.mxu0 %v598
    %610 = vmatmul.bf16.gmra.mxu0 %v170
    %v611 = vpop.f32.mrf.mxu0
    %v612 = vadd.f32 %v588, %v611
    %v613 = vpop.f32.mrf.mxu0
    %614 = vdwg.mxu0
    %v615 = vxor.u32 %v612, 2147483648
    %v616 = vmul.f32 %v615, 1.442695
    %v617 = vpow.pop %v616
    %v618 = vadd.f32 %v617, 1.0
    %v619 = vrcp.pop %v618
    %v620 = vmul.f32 %v618, %v619
    %v621 = vsub.f32 1.0, %v620
    %v622 = vmul.f32 %v619, %v621
    %v623 = vadd.f32 %v619, %v622
    %vm624 = vweird.f32 %v618
    %vm625 = vweird.f32 %v619
    %vm626 = vmor %vm624, %vm625
    %v627 = vsel %vm626, %v619, %v623
    %v628 = vand.u32 2147483647, %v618
    %vm629 = vcmp.eq.f32.partialorder %v628, 8.507059e+37
    %v630 = vand.u32 %v618, 2147483648
    %v631 = vor.u32 1.1754944e-38, %v630
    %v632 = vsel %vm629, %v631, %v627
    %v633 = vmul.f32 1.0, %v632
    %v634 = vtanh.pop %v612
    %636 = vrot.lane.b32.xlu0 %v634, 64
    %v637 = vpop.permute.xlu0 %636
    %v639 = vmul.f32 %v633, %v637
    %v640 = vtanh.pop %v639
    %642 = vrot.lane.b32.xlu0 %v640, 96
    %v643 = vpop.permute.xlu0 %642
    %v645 = vmul.f32 %v633, %v643
    %646 = vmatpush.bf16.msra.mxu0 0
    %647 = vmatpush.bf16.msra.mxu0 0
    %648 = vmatpush.bf16.msra.mxu0 0
    %649 = vmatpush.bf16.msra.mxu0 0
    %650 = vmatpush.bf16.msra.mxu0 0
    %651 = vmatpush.bf16.msra.mxu0 0
    %652 = vmatpush.bf16.msra.mxu0 %v599
    %653 = vmatpush.bf16.msra.mxu0 %v598
    %654 = vmatmul.bf16.gmra.mxu0 %v231
    %v655 = vpop.f32.mrf.mxu0
    %v656 = vadd.f32 %v588, %v655
    %v657 = vpop.f32.mrf.mxu0
    %658 = vdwg.mxu0
    %v659 = vpack.c.bf16 %v645, %v645
    %661 = vrot.lane.b32.xlu0 %v659, 32
    %v662 = vpop.permute.xlu0 %661
    %v667 = vunpack.c.l.b16 %v578
    %v668 = vunpack.c.l.b16 %v579
    %v669 = vunpack.c.l.b16 %v580
    %v670 = vunpack.c.l.b16 %v581
    %v671 = vpack.c.b16 %v668, %v667
    %v672 = vpack.c.b16 %v670, %v669
    %v676 = vsel %vm76, %v662, 0
    %678 = vmatpush.bf16.msra.mxu0 0
    %679 = vmatpush.bf16.msra.mxu0 0
    %680 = vmatpush.bf16.msra.mxu0 0
    %681 = vmatpush.bf16.msra.mxu0 0
    %682 = vmatpush.bf16.msra.mxu0 0
    %683 = vmatpush.bf16.msra.mxu0 0
    %684 = vmatpush.bf16.msra.mxu0 %v672
    %685 = vmatpush.bf16.msra.mxu0 %v671
    %686 = vmatmul.bf16.gmra.mxu0 %v676
    %v687 = vpop.f32.mrf.mxu0
    %v688 = vadd.f32 %v656, %v687
    %v689 = vpop.f32.mrf.mxu0
    %690 = vdwg.mxu0
    %v691 = vxor.u32 %v688, 2147483648
    %v692 = vmul.f32 %v691, 1.442695
    %v693 = vpow.pop %v692
    %v694 = vadd.f32 %v693, 1.0
    %v695 = vrcp.pop %v694
    %v696 = vmul.f32 %v694, %v695
    %v697 = vsub.f32 1.0, %v696
    %v698 = vmul.f32 %v695, %v697
    %v699 = vadd.f32 %v695, %v698
    %vm700 = vweird.f32 %v694
    %vm701 = vweird.f32 %v695
    %vm702 = vmor %vm700, %vm701
    %v703 = vsel %vm702, %v695, %v699
    %v704 = vand.u32 2147483647, %v694
    %vm705 = vcmp.eq.f32.partialorder %v704, 8.507059e+37
    %v706 = vand.u32 %v694, 2147483648
    %v707 = vor.u32 1.1754944e-38, %v706
    %v708 = vsel %vm705, %v707, %v703
    %v709 = vmul.f32 1.0, %v708
    %v710 = vtanh.pop %v688
    %712 = vrot.lane.b32.xlu0 %v639, 32
    %v713 = vpop.permute.xlu0 %712
    %v715 = vmul.f32 %v709, %v713
    %717 = vrot.lane.b32.xlu0 %v710, 64
    %v718 = vpop.permute.xlu0 %717
    %v720 = vmul.f32 %v709, %v718
    %722 = vrot.lane.b32.xlu0 %v720, 32
    %v723 = vpop.permute.xlu0 %722
    %v725 = vadd.f32 %v715, %v723
    %v726 = vtanh.pop %v725
    %728 = vrot.lane.b32.xlu0 %v726, 64
    %v729 = vpop.permute.xlu0 %728
    %v731 = vmul.f32 %v709, %v729
    %732 = vmatpush.bf16.msra.mxu0 0
    %733 = vmatpush.bf16.msra.mxu0 0
    %734 = vmatpush.bf16.msra.mxu0 0
    %735 = vmatpush.bf16.msra.mxu0 0
    %736 = vmatpush.bf16.msra.mxu0 0
    %737 = vmatpush.bf16.msra.mxu0 0
    %738 = vmatpush.bf16.msra.mxu0 %v599
    %739 = vmatpush.bf16.msra.mxu0 %v598
    %740 = vmatmul.bf16.gmra.mxu0 %v288
    %v741 = vpop.f32.mrf.mxu0
    %v742 = vadd.f32 %v588, %v741
    %v743 = vpop.f32.mrf.mxu0
    %744 = vdwg.mxu0
    %v745 = vpack.c.bf16 %v731, %v731
    %747 = vrot.lane.b32.xlu0 %v745, 32
    %v748 = vpop.permute.xlu0 %747
    %v750 = vsel %vm76, %v748, 0
    %752 = vmatpush.bf16.msra.mxu0 0
    %753 = vmatpush.bf16.msra.mxu0 0
    %754 = vmatpush.bf16.msra.mxu0 0
    %755 = vmatpush.bf16.msra.mxu0 0
    %756 = vmatpush.bf16.msra.mxu0 0
    %757 = vmatpush.bf16.msra.mxu0 0
    %758 = vmatpush.bf16.msra.mxu0 %v672
    %759 = vmatpush.bf16.msra.mxu0 %v671
    %760 = vmatmul.bf16.gmra.mxu0 %v750
    %v761 = vpop.f32.mrf.mxu0
    %v762 = vadd.f32 %v742, %v761
    %v763 = vpop.f32.mrf.mxu0
    %764 = vdwg.mxu0
    %v765 = vxor.u32 %v762, 2147483648
    %v766 = vmul.f32 %v765, 1.442695
    %v767 = vpow.pop %v766
    %v768 = vadd.f32 %v767, 1.0
    %v769 = vrcp.pop %v768
    %v770 = vmul.f32 %v768, %v769
    %v771 = vsub.f32 1.0, %v770
    %v772 = vmul.f32 %v769, %v771
    %v773 = vadd.f32 %v769, %v772
    %vm774 = vweird.f32 %v768
    %vm775 = vweird.f32 %v769
    %vm776 = vmor %vm774, %vm775
    %v777 = vsel %vm776, %v769, %v773
    %v778 = vand.u32 2147483647, %v768
    %vm779 = vcmp.eq.f32.partialorder %v778, 8.507059e+37
    %v780 = vand.u32 %v768, 2147483648
    %v781 = vor.u32 1.1754944e-38, %v780
    %v782 = vsel %vm779, %v781, %v777
    %v783 = vmul.f32 1.0, %v782
    %v784 = vtanh.pop %v762
    %v785 = vmul.f32 %v783, %v725
    %787 = vrot.lane.b32.xlu0 %v784, 64
    %v788 = vpop.permute.xlu0 %787
    %v790 = vmul.f32 %v783, %v788
    %792 = vrot.lane.b32.xlu0 %v790, 32
    %v793 = vpop.permute.xlu0 %792
    %v795 = vadd.f32 %v785, %v793
    %v796 = vtanh.pop %v795
    %798 = vrot.lane.b32.xlu0 %v796, 64
    %v799 = vpop.permute.xlu0 %798
    %v801 = vmul.f32 %v783, %v799
    %802 = vmatpush.bf16.msra.mxu0 0
    %803 = vmatpush.bf16.msra.mxu0 0
    %804 = vmatpush.bf16.msra.mxu0 0
    %805 = vmatpush.bf16.msra.mxu0 0
    %806 = vmatpush.bf16.msra.mxu0 0
    %807 = vmatpush.bf16.msra.mxu0 0
    %808 = vmatpush.bf16.msra.mxu0 %v599
    %809 = vmatpush.bf16.msra.mxu0 %v598
    %810 = vmatmul.bf16.gmra.mxu0 %v345
    %v811 = vpop.f32.mrf.mxu0
    %v812 = vadd.f32 %v588, %v811
    %v813 = vpop.f32.mrf.mxu0
    %814 = vdwg.mxu0
    %v815 = vpack.c.bf16 %v801, %v801
    %817 = vrot.lane.b32.xlu0 %v815, 32
    %v818 = vpop.permute.xlu0 %817
    %v820 = vsel %vm76, %v818, 0
    %822 = vmatpush.bf16.msra.mxu0 0
    %823 = vmatpush.bf16.msra.mxu0 0
    %824 = vmatpush.bf16.msra.mxu0 0
    %825 = vmatpush.bf16.msra.mxu0 0
    %826 = vmatpush.bf16.msra.mxu0 0
    %827 = vmatpush.bf16.msra.mxu0 0
    %828 = vmatpush.bf16.msra.mxu0 %v672
    %829 = vmatpush.bf16.msra.mxu0 %v671
    %830 = vmatmul.bf16.gmra.mxu0 %v820
    %v831 = vpop.f32.mrf.mxu0
    %v832 = vadd.f32 %v812, %v831
    %v833 = vpop.f32.mrf.mxu0
    %834 = vdwg.mxu0
    %v835 = vxor.u32 %v832, 2147483648
    %v836 = vmul.f32 %v835, 1.442695
    %v837 = vpow.pop %v836
    %v838 = vadd.f32 %v837, 1.0
    %v839 = vrcp.pop %v838
    %v840 = vmul.f32 %v838, %v839
    %v841 = vsub.f32 1.0, %v840
    %v842 = vmul.f32 %v839, %v841
    %v843 = vadd.f32 %v839, %v842
    %vm844 = vweird.f32 %v838
    %vm845 = vweird.f32 %v839
    %vm846 = vmor %vm844, %vm845
    %v847 = vsel %vm846, %v839, %v843
    %v848 = vand.u32 2147483647, %v838
    %vm849 = vcmp.eq.f32.partialorder %v848, 8.507059e+37
    %v850 = vand.u32 %v838, 2147483648
    %v851 = vor.u32 1.1754944e-38, %v850
    %v852 = vsel %vm849, %v851, %v847
    %v853 = vmul.f32 1.0, %v852
    %v854 = vtanh.pop %v832
    %v855 = vmul.f32 %v853, %v795
    %857 = vrot.lane.b32.xlu0 %v854, 64
    %v858 = vpop.permute.xlu0 %857
    %v860 = vmul.f32 %v853, %v858
    %862 = vrot.lane.b32.xlu0 %v860, 32
    %v863 = vpop.permute.xlu0 %862
    %v865 = vadd.f32 %v855, %v863
    %v866 = vtanh.pop %v865
    %868 = vrot.lane.b32.xlu0 %v866, 64
    %v869 = vpop.permute.xlu0 %868
    %v871 = vmul.f32 %v853, %v869
    %872 = vmatpush.bf16.msra.mxu0 0
    %873 = vmatpush.bf16.msra.mxu0 0
    %874 = vmatpush.bf16.msra.mxu0 0
    %875 = vmatpush.bf16.msra.mxu0 0
    %876 = vmatpush.bf16.msra.mxu0 0
    %877 = vmatpush.bf16.msra.mxu0 0
    %878 = vmatpush.bf16.msra.mxu0 %v599
    %879 = vmatpush.bf16.msra.mxu0 %v598
    %880 = vmatmul.bf16.gmra.mxu0 %v402
    %v881 = vpop.f32.mrf.mxu0
    %v882 = vadd.f32 %v588, %v881
    %v883 = vpop.f32.mrf.mxu0
    %884 = vdwg.mxu0
    %v885 = vpack.c.bf16 %v871, %v871
    %887 = vrot.lane.b32.xlu0 %v885, 32
    %v888 = vpop.permute.xlu0 %887
    %v890 = vsel %vm76, %v888, 0
    %892 = vmatpush.bf16.msra.mxu0 0
    %893 = vmatpush.bf16.msra.mxu0 0
    %894 = vmatpush.bf16.msra.mxu0 0
    %895 = vmatpush.bf16.msra.mxu0 0
    %896 = vmatpush.bf16.msra.mxu0 0
    %897 = vmatpush.bf16.msra.mxu0 0
    %898 = vmatpush.bf16.msra.mxu0 %v672
    %899 = vmatpush.bf16.msra.mxu0 %v671
    %900 = vmatmul.bf16.gmra.mxu0 %v890
    %v901 = vpop.f32.mrf.mxu0
    %v902 = vadd.f32 %v882, %v901
    %v903 = vpop.f32.mrf.mxu0
    %904 = vdwg.mxu0
    %v905 = vxor.u32 %v902, 2147483648
    %v906 = vmul.f32 %v905, 1.442695
    %v907 = vpow.pop %v906
    %v908 = vadd.f32 %v907, 1.0
    %v909 = vrcp.pop %v908
    %v910 = vmul.f32 %v908, %v909
    %v911 = vsub.f32 1.0, %v910
    %v912 = vmul.f32 %v909, %v911
    %v913 = vadd.f32 %v909, %v912
    %vm914 = vweird.f32 %v908
    %vm915 = vweird.f32 %v909
    %vm916 = vmor %vm914, %vm915
    %v917 = vsel %vm916, %v909, %v913
    %v918 = vand.u32 2147483647, %v908
    %vm919 = vcmp.eq.f32.partialorder %v918, 8.507059e+37
    %v920 = vand.u32 %v908, 2147483648
    %v921 = vor.u32 1.1754944e-38, %v920
    %v922 = vsel %vm919, %v921, %v917
    %v923 = vmul.f32 1.0, %v922
    %v924 = vtanh.pop %v902
    %v925 = vmul.f32 %v923, %v865
    %927 = vrot.lane.b32.xlu0 %v924, 64
    %v928 = vpop.permute.xlu0 %927
    %v930 = vmul.f32 %v923, %v928
    %932 = vrot.lane.b32.xlu0 %v930, 32
    %v933 = vpop.permute.xlu0 %932
    %v935 = vadd.f32 %v925, %v933
    %v936 = vtanh.pop %v935
    %938 = vrot.lane.b32.xlu0 %v936, 64
    %v939 = vpop.permute.xlu0 %938
    %v941 = vmul.f32 %v923, %v939
    %942 = vmatpush.bf16.msra.mxu0 0
    %943 = vmatpush.bf16.msra.mxu0 0
    %944 = vmatpush.bf16.msra.mxu0 0
    %945 = vmatpush.bf16.msra.mxu0 0
    %946 = vmatpush.bf16.msra.mxu0 0
    %947 = vmatpush.bf16.msra.mxu0 0
    %948 = vmatpush.bf16.msra.mxu0 %v599
    %949 = vmatpush.bf16.msra.mxu0 %v598
    %950 = vmatmul.bf16.gmra.mxu0 %v459
    %v951 = vpop.f32.mrf.mxu0
    %v952 = vadd.f32 %v588, %v951
    %v953 = vpop.f32.mrf.mxu0
    %954 = vdwg.mxu0
    %v955 = vpack.c.bf16 %v941, %v941
    %957 = vrot.lane.b32.xlu0 %v955, 32
    %v958 = vpop.permute.xlu0 %957
    %v960 = vsel %vm76, %v958, 0
    %962 = vmatpush.bf16.msra.mxu0 0
    %963 = vmatpush.bf16.msra.mxu0 0
    %964 = vmatpush.bf16.msra.mxu0 0
    %965 = vmatpush.bf16.msra.mxu0 0
    %966 = vmatpush.bf16.msra.mxu0 0
    %967 = vmatpush.bf16.msra.mxu0 0
    %968 = vmatpush.bf16.msra.mxu0 %v672
    %969 = vmatpush.bf16.msra.mxu0 %v671
    %970 = vmatmul.bf16.gmra.mxu0 %v960
    %v971 = vpop.f32.mrf.mxu0
    %v972 = vadd.f32 %v952, %v971
    %v973 = vpop.f32.mrf.mxu0
    %974 = vdwg.mxu0
    %v975 = vxor.u32 %v972, 2147483648
    %v976 = vmul.f32 %v975, 1.442695
    %v977 = vpow.pop %v976
    %v978 = vadd.f32 %v977, 1.0
    %v979 = vrcp.pop %v978
    %v980 = vmul.f32 %v978, %v979
    %v981 = vsub.f32 1.0, %v980
    %v982 = vmul.f32 %v979, %v981
    %v983 = vadd.f32 %v979, %v982
    %vm984 = vweird.f32 %v978
    %vm985 = vweird.f32 %v979
    %vm986 = vmor %vm984, %vm985
    %v987 = vsel %vm986, %v979, %v983
    %v988 = vand.u32 2147483647, %v978
    %vm989 = vcmp.eq.f32.partialorder %v988, 8.507059e+37
    %v990 = vand.u32 %v978, 2147483648
    %v991 = vor.u32 1.1754944e-38, %v990
    %v992 = vsel %vm989, %v991, %v987
    %v993 = vmul.f32 1.0, %v992
    %v994 = vtanh.pop %v972
    %v995 = vmul.f32 %v993, %v935
    %997 = vrot.lane.b32.xlu0 %v994, 64
    %v998 = vpop.permute.xlu0 %997
    %v1000 = vmul.f32 %v993, %v998
    %1002 = vrot.lane.b32.xlu0 %v1000, 32
    %v1003 = vpop.permute.xlu0 %1002
    %v1005 = vadd.f32 %v995, %v1003
    %v1006 = vtanh.pop %v1005
    %1008 = vrot.lane.b32.xlu0 %v1006, 64
    %v1009 = vpop.permute.xlu0 %1008
    %v1011 = vmul.f32 %v993, %v1009
    %1012 = vmatpush.bf16.msra.mxu0 0
    %1013 = vmatpush.bf16.msra.mxu0 0
    %1014 = vmatpush.bf16.msra.mxu0 0
    %1015 = vmatpush.bf16.msra.mxu0 0
    %1016 = vmatpush.bf16.msra.mxu0 0
    %1017 = vmatpush.bf16.msra.mxu0 0
    %1018 = vmatpush.bf16.msra.mxu0 %v599
    %1019 = vmatpush.bf16.msra.mxu0 %v598
    %1020 = vmatmul.bf16.gmra.mxu0 %v516
    %v1021 = vpop.f32.mrf.mxu0
    %v1022 = vadd.f32 %v588, %v1021
    %v1023 = vpop.f32.mrf.mxu0
    %1024 = vdwg.mxu0
    %v1025 = vpack.c.bf16 %v1011, %v1011
    %1027 = vrot.lane.b32.xlu0 %v1025, 32
    %v1028 = vpop.permute.xlu0 %1027
    %v1030 = vsel %vm76, %v1028, 0
    %1032 = vmatpush.bf16.msra.mxu0 0
    %1033 = vmatpush.bf16.msra.mxu0 0
    %1034 = vmatpush.bf16.msra.mxu0 0
    %1035 = vmatpush.bf16.msra.mxu0 0
    %1036 = vmatpush.bf16.msra.mxu0 0
    %1037 = vmatpush.bf16.msra.mxu0 0
    %1038 = vmatpush.bf16.msra.mxu0 %v672
    %1039 = vmatpush.bf16.msra.mxu0 %v671
    %1040 = vmatmul.bf16.gmra.mxu0 %v1030
    %v1041 = vpop.f32.mrf.mxu0
    %v1042 = vadd.f32 %v1022, %v1041
    %v1043 = vpop.f32.mrf.mxu0
    %1044 = vdwg.mxu0
    %v1045 = vxor.u32 %v1042, 2147483648
    %v1046 = vmul.f32 %v1045, 1.442695
    %v1047 = vpow.pop %v1046
    %v1048 = vadd.f32 %v1047, 1.0
    %v1049 = vrcp.pop %v1048
    %v1050 = vmul.f32 %v1048, %v1049
    %v1051 = vsub.f32 1.0, %v1050
    %v1052 = vmul.f32 %v1049, %v1051
    %v1053 = vadd.f32 %v1049, %v1052
    %vm1054 = vweird.f32 %v1048
    %vm1055 = vweird.f32 %v1049
    %vm1056 = vmor %vm1054, %vm1055
    %v1057 = vsel %vm1056, %v1049, %v1053
    %v1058 = vand.u32 2147483647, %v1048
    %vm1059 = vcmp.eq.f32.partialorder %v1058, 8.507059e+37
    %v1060 = vand.u32 %v1048, 2147483648
    %v1061 = vor.u32 1.1754944e-38, %v1060
    %v1062 = vsel %vm1059, %v1061, %v1057
    %v1063 = vmul.f32 1.0, %v1062
    %v1064 = vtanh.pop %v1042
    %v1065 = vmul.f32 %v1063, %v1005
    %1067 = vrot.lane.b32.xlu0 %v1064, 64
    %v1068 = vpop.permute.xlu0 %1067
    %v1070 = vmul.f32 %v1063, %v1068
    %1072 = vrot.lane.b32.xlu0 %v1070, 32
    %v1073 = vpop.permute.xlu0 %1072
    %v1075 = vadd.f32 %v1065, %v1073
    %v1076 = vtanh.pop %v1075
    %1078 = vrot.lane.b32.xlu0 %v1076, 64
    %v1079 = vpop.permute.xlu0 %1078
    %v1081 = vmul.f32 %v1063, %v1079
    %v1082 = vpack.c.bf16 %v567, %v567
    %1084 = vrot.lane.b32.xlu0 %v1082, 32
    %v1085 = vpop.permute.xlu0 %1084
    %v1087 = vsel %vm76, %v1085, 0
    %1089 = vmatpush.bf16.msra.mxu0 0
    %1090 = vmatpush.bf16.msra.mxu0 0
    %1091 = vmatpush.bf16.msra.mxu0 0
    %1092 = vmatpush.bf16.msra.mxu0 0
    %1093 = vmatpush.bf16.msra.mxu0 0
    %1094 = vmatpush.bf16.msra.mxu0 0
    %1095 = vmatpush.bf16.msra.mxu0 %v599
    %1096 = vmatpush.bf16.msra.mxu0 %v598
    %1097 = vmatmul.bf16.gmra.mxu0 %v1087
    %v1098 = vpop.f32.mrf.mxu0
    %v1099 = vadd.f32 %v588, %v1098
    %v1100 = vpop.f32.mrf.mxu0
    %1101 = vdwg.mxu0
    %v1102 = vpack.c.bf16 %v1081, %v1081
    %1104 = vrot.lane.b32.xlu0 %v1102, 32
    %v1105 = vpop.permute.xlu0 %1104
    %v1107 = vsel %vm76, %v1105, 0
    %1109 = vmatpush.bf16.msra.mxu0 0
    %1110 = vmatpush.bf16.msra.mxu0 0
    %1111 = vmatpush.bf16.msra.mxu0 0
    %1112 = vmatpush.bf16.msra.mxu0 0
    %1113 = vmatpush.bf16.msra.mxu0 0
    %1114 = vmatpush.bf16.msra.mxu0 0
    %1115 = vmatpush.bf16.msra.mxu0 %v672
    %1116 = vmatpush.bf16.msra.mxu0 %v671
    %1117 = vmatmul.bf16.gmra.mxu0 %v1107
    %v1118 = vpop.f32.mrf.mxu0
    %v1119 = vadd.f32 %v1099, %v1118
    %v1120 = vpop.f32.mrf.mxu0
    %1121 = vdwg.mxu0
    %v1122 = vxor.u32 %v1119, 2147483648
    %v1123 = vmul.f32 %v1122, 1.442695
    %v1124 = vpow.pop %v1123
    %v1125 = vadd.f32 %v1124, 1.0
    %v1126 = vrcp.pop %v1125
    %v1127 = vmul.f32 %v1125, %v1126
    %v1128 = vsub.f32 1.0, %v1127
    %v1129 = vmul.f32 %v1126, %v1128
    %v1130 = vadd.f32 %v1126, %v1129
    %vm1131 = vweird.f32 %v1125
    %vm1132 = vweird.f32 %v1126
    %vm1133 = vmor %vm1131, %vm1132
    %v1134 = vsel %vm1133, %v1126, %v1130
    %v1135 = vand.u32 2147483647, %v1125
    %vm1136 = vcmp.eq.f32.partialorder %v1135, 8.507059e+37
    %v1137 = vand.u32 %v1125, 2147483648
    %v1138 = vor.u32 1.1754944e-38, %v1137
    %v1139 = vsel %vm1136, %v1138, %v1134
    %v1140 = vmul.f32 1.0, %v1139
    %v1141 = vtanh.pop %v1119
    %v1142 = vmul.f32 %v1140, %v1075
    %1144 = vrot.lane.b32.xlu0 %v1141, 64
    %v1145 = vpop.permute.xlu0 %1144
    %v1147 = vmul.f32 %v1140, %v1145
    %1149 = vrot.lane.b32.xlu0 %v1147, 32
    %v1150 = vpop.permute.xlu0 %1149
    %v1152 = vadd.f32 %v1142, %v1150
    %v1153 = vtanh.pop %v1152
    %1155 = vrot.lane.b32.xlu0 %v1153, 64
    %v1156 = vpop.permute.xlu0 %1155
    %v1158 = vmul.f32 %v1140, %v1156
    %1160 = vrot.lane.b32.xlu0 %v1158, 32
    %v1161 = vpop.permute.xlu0 %1160
    %s1163 = scalar_lea.vmem [#allocation4], 8
    %1164 = vst.msk [vmem:[%s1163] sm:$0xff] %vm76, %v1161
    %1166 = vrot.lane.b32.xlu0 %v1152, 96
    %v1167 = vpop.permute.xlu0 %1166
    %s1169 = scalar_lea.vmem [#allocation6], 8
    %1170 = vst.msk [vmem:[%s1169] sm:$0xff] %vm76, %v1167
    %v1171 = vpack.c.bf16 %v731, %v645
    %v1172 = vpack.c.bf16 %v871, %v801
    %v1173 = vpack.c.bf16 %v1011, %v941
    %v1174 = vpack.c.bf16 %v1158, %v1081
    %v1175 = vld [vmem:[%s7] sm:$0xf]
    %v1176 = vld [vmem:[%s7 + $0x4] sm:$0xf]
    %v1177 = vld [vmem:[%s7 + $0x8] sm:$0xf]
    %v1178 = vld [vmem:[%s7 + $0xc] sm:$0xf]
    %v1179 = vld [vmem:[%s8] sm:$0x1]
    %v1181 = vperm.slane %v1179, 0
    %1187 = vrot.lane.b32.xlu0 %v1171, 32
    %v1188 = vpop.permute.xlu0 %1187
    %1189 = vrot.lane.b32.xlu0 %v1172, 32
    %v1190 = vpop.permute.xlu0 %1189
    %1191 = vrot.lane.b32.xlu0 %v1173, 32
    %v1192 = vpop.permute.xlu0 %1191
    %1193 = vrot.lane.b32.xlu0 %v1174, 32
    %v1194 = vpop.permute.xlu0 %1193
    %v1199 = vunpack.c.l.b16 %v1175
    %v1200 = vunpack.c.l.b16 %v1176
    %v1201 = vunpack.c.l.b16 %v1177
    %v1202 = vunpack.c.l.b16 %v1178
    %v1203 = vpack.c.b16 %v1200, %v1199
    %v1204 = vpack.c.b16 %v1202, %v1201
    %v1208 = vsel %vm76, %v1188, 0
    %v1211 = vsel %vm76, %v1190, 0
    %v1214 = vsel %vm76, %v1192, 0
    %v1217 = vsel %vm76, %v1194, 0
    %1219 = vmatpush.bf16.msra.mxu0 0
    %1220 = vmatpush.bf16.msra.mxu0 0
    %1221 = vmatpush.bf16.msra.mxu0 0
    %1222 = vmatpush.bf16.msra.mxu0 0
    %1223 = vmatpush.bf16.msra.mxu0 0
    %1224 = vmatpush.bf16.msra.mxu0 0
    %1225 = vmatpush.bf16.msra.mxu0 %v1204
    %1226 = vmatpush.bf16.msra.mxu0 %v1203
    %1227 = vmatmul.bf16.gmra.mxu0 %v1208
    %v1228 = vpop.f32.mrf.mxu0
    %v1229 = vadd.f32 %v1181, %v1228
    %v1230 = vpop.f32.mrf.mxu0
    %v1231 = vadd.f32 %v1181, %v1230
    %1232 = vmatmul.bf16.gmra.mxu0 %v1211
    %v1233 = vpop.f32.mrf.mxu0
    %v1234 = vadd.f32 %v1181, %v1233
    %v1235 = vpop.f32.mrf.mxu0
    %v1236 = vadd.f32 %v1181, %v1235
    %1237 = vmatmul.bf16.gmra.mxu0 %v1214
    %v1238 = vpop.f32.mrf.mxu0
    %v1239 = vadd.f32 %v1181, %v1238
    %v1240 = vpop.f32.mrf.mxu0
    %v1241 = vadd.f32 %v1181, %v1240
    %1242 = vmatmul.bf16.gmra.mxu0 %v1217
    %v1243 = vpop.f32.mrf.mxu0
    %v1244 = vadd.f32 %v1181, %v1243
    %v1245 = vpop.f32.mrf.mxu0
    %v1246 = vadd.f32 %v1181, %v1245
    %1247 = vdwg.mxu0
    %v1248 = vmax.f32 %v1229, 0.0
    %v1249 = vmax.f32 %v1231, 0.0
    %v1250 = vmax.f32 %v1234, 0.0
    %v1251 = vmax.f32 %v1236, 0.0
    %v1252 = vmax.f32 %v1239, 0.0
    %v1253 = vmax.f32 %v1241, 0.0
    %v1254 = vmax.f32 %v1244, 0.0
    %v1255 = vmax.f32 %v1246, 0.0
    %v1256 = vpack.c.bf16 %v1249, %v1248
    %v1257 = vpack.c.bf16 %v1251, %v1250
    %v1258 = vpack.c.bf16 %v1253, %v1252
    %v1259 = vpack.c.bf16 %v1255, %v1254
    %v1260 = vld [vmem:[%s9] sm:$0xf]
    %v1261 = vld [vmem:[%s9 + $0x4] sm:$0xf]
    %v1262 = vld [vmem:[%s9 + $0x8] sm:$0xf]
    %v1263 = vld [vmem:[%s9 + $0xc] sm:$0xf]
    %v1264 = vld [vmem:[%s10] sm:$0x1]
    %v1266 = vperm.slane %v1264, 0
    %v1272 = vunpack.c.l.b16 %v1260
    %v1273 = vunpack.c.l.b16 %v1261
    %v1274 = vunpack.c.l.b16 %v1262
    %v1275 = vunpack.c.l.b16 %v1263
    %v1276 = vpack.c.b16 %v1273, %v1272
    %v1277 = vpack.c.b16 %v1275, %v1274
    %v1281 = vsel %vm76, %v1256, 0
    %v1284 = vsel %vm76, %v1257, 0
    %v1287 = vsel %vm76, %v1258, 0
    %v1290 = vsel %vm76, %v1259, 0
    %1292 = vmatpush.bf16.msra.mxu0 0
    %1293 = vmatpush.bf16.msra.mxu0 0
    %1294 = vmatpush.bf16.msra.mxu0 0
    %1295 = vmatpush.bf16.msra.mxu0 0
    %1296 = vmatpush.bf16.msra.mxu0 0
    %1297 = vmatpush.bf16.msra.mxu0 0
    %1298 = vmatpush.bf16.msra.mxu0 %v1277
    %1299 = vmatpush.bf16.msra.mxu0 %v1276
    %1300 = vmatmul.bf16.gmra.mxu0 %v1281
    %v1301 = vpop.f32.mrf.mxu0
    %v1302 = vadd.f32 %v1266, %v1301
    %v1303 = vpop.f32.mrf.mxu0
    %v1304 = vadd.f32 %v1266, %v1303
    %1305 = vmatmul.bf16.gmra.mxu0 %v1284
    %v1306 = vpop.f32.mrf.mxu0
    %v1307 = vadd.f32 %v1266, %v1306
    %v1308 = vpop.f32.mrf.mxu0
    %v1309 = vadd.f32 %v1266, %v1308
    %1310 = vmatmul.bf16.gmra.mxu0 %v1287
    %v1311 = vpop.f32.mrf.mxu0
    %v1312 = vadd.f32 %v1266, %v1311
    %v1313 = vpop.f32.mrf.mxu0
    %v1314 = vadd.f32 %v1266, %v1313
    %1315 = vmatmul.bf16.gmra.mxu0 %v1290
    %v1316 = vpop.f32.mrf.mxu0
    %v1317 = vadd.f32 %v1266, %v1316
    %v1318 = vpop.f32.mrf.mxu0
    %v1319 = vadd.f32 %v1266, %v1318
    %1320 = vdwg.mxu0
    %1321 = vst [vmem:[#allocation2] sm:$0xff] %v1302
    %1322 = vst [vmem:[#allocation2 + $0x8] sm:$0xff] %v1304
    %1323 = vst [vmem:[#allocation2 + $0x10] sm:$0xff] %v1307
    %1324 = vst [vmem:[#allocation2 + $0x18] sm:$0xff] %v1309
    %1325 = vst [vmem:[#allocation2 + $0x20] sm:$0xff] %v1312
    %1326 = vst [vmem:[#allocation2 + $0x28] sm:$0xff] %v1314
    %1327 = vst [vmem:[#allocation2 + $0x30] sm:$0xff] %v1317
    %1328 = vst [vmem:[#allocation2 + $0x38] sm:$0xff] %v1319
    // Predicated region
    $region46: #{tpu_custom_call.1} parent=1 // pred_check
      _
    $region47: #{tpu_custom_call.1} parent=1 // pred_check_branch
      %1330 = sbr.rel (0) target = $region49
    $region48: #{tpu_custom_call.1} parent=1 // pred_region
      %1332 = vsyncadd [#allocation3], 0
      %s1333 = sshll.u32 [#allocation2], 4
      %s1334 = int_to_ptr.vmem [resolvable:$true] %s1333
      %s1335 = sshll.u32 %s11, 4
      %s1336 = int_to_ptr.hbm [resolvable:$true] %s1335
      %1341 = dma.vmem_to_hbm [thread:$0]  %s1334, 1024, %s1336, [#allocation3], 128, 128, 8
    $region49: #{tpu_custom_call.1} parent=1 // pred_fallthru
      _
    // Predicated region
    $region50: #{tpu_custom_call.1} parent=1 // pred_check
      _
    $region51: #{tpu_custom_call.1} parent=1 // pred_check_branch
      %1343 = sbr.rel (0) target = $region53
    $region52: #{tpu_custom_call.1} parent=1 // pred_region
      %1345 = vsyncadd [#allocation5], 0
      %s1346 = sshll.u32 [#allocation4], 4
      %s1347 = int_to_ptr.vmem [resolvable:$true] %s1346
      %s1348 = sshll.u32 %s12, 4
      %s1349 = int_to_ptr.hbm [resolvable:$true] %s1348
      %1354 = dma.vmem_to_hbm [thread:$0]  %s1347, 256, %s1349, [#allocation5], 128, 128, 8
    $region53: #{tpu_custom_call.1} parent=1 // pred_fallthru
      _
    // Predicated region
    $region54: #{tpu_custom_call.1} parent=1 // pred_check
      _
    $region55: #{tpu_custom_call.1} parent=1 // pred_check_branch
      %1356 = sbr.rel (0) target = $region57
    $region56: #{tpu_custom_call.1} parent=1 // pred_region
      %1358 = vsyncadd [#allocation5], 0
      %s1359 = sshll.u32 [#allocation6], 4
      %s1360 = int_to_ptr.vmem [resolvable:$true] %s1359
      %s1361 = sshll.u32 %s13, 4
      %s1362 = int_to_ptr.hbm [resolvable:$true] %s1361
      %1367 = dma.vmem_to_hbm [thread:$0]  %s1360, 256, %s1362, [#allocation5], 128, 128, 8
    $region57: #{tpu_custom_call.1} parent=1 // pred_fallthru
      _
    // Predicated region
    $region58: #{tpu_custom_call.1} parent=1 // pred_check
      _
    $region59: #{tpu_custom_call.1} parent=1 // pred_check_branch
      %1369 = sbr.rel (0) target = $region61
    $region60: #{tpu_custom_call.1} parent=1 // pred_region
      %1371 = dma.done [#allocation3], 1024
    $region61: #{tpu_custom_call.1} parent=1 // pred_fallthru
      _
    // Predicated region
    $region62: #{tpu_custom_call.1} parent=1 // pred_check
      _
    $region63: #{tpu_custom_call.1} parent=1 // pred_check_branch
      %1373 = sbr.rel (0) target = $region65
    $region64: #{tpu_custom_call.1} parent=1 // pred_region
      %1375 = dma.done [#allocation5], 256
    $region65: #{tpu_custom_call.1} parent=1 // pred_fallthru
      _
    // Predicated region
    $region66: #{tpu_custom_call.1} parent=1 // pred_check
      _
    $region67: #{tpu_custom_call.1} parent=1 // pred_check_branch
      %1377 = sbr.rel (0) target = $region69
    $region68: #{tpu_custom_call.1} parent=1 // pred_region
      %1379 = dma.done [#allocation5], 256
    $region69: #{tpu_custom_call.1} parent=1 // pred_fallthru
      _
    %1380 = vsyncpa [#allocation3], 1
    %1381 = vsyncpa [#allocation5], 1

</llo_original>
